<compile_context>
chip_gen: v7x
topology: tpu7x:2x2x1
jax: 0.10.0
libtpu: 0.0.40
codegen_flags: <defaults>
</compile_context>

<pallas_src>
import jax
import jax.numpy as jnp
from jax.experimental import pallas as pl
from jax.experimental.pallas import tpu as pltpu


def _er_estimate_kernel(x_ref,
                        w1_ref, s1_ref, t1_ref,
                        w2_ref, s2_ref, t2_ref,
                        w3_ref, s3_ref, t3_ref,
                        w4_ref, b4_ref,
                        o_ref):
    """Fused conv1d(k=1) + folded-BN + ReLU chain on one (C_in, TN) point tile.

    x_ref : (C1, TN) bf16      channels x points (native NCW tile, one batch)
    wK    : (C_out, C_in) bf16 conv weights (PyTorch layout), h = W @ x
    sK,tK : (C_out, 1) f32     BN folded scale / shift (conv bias included)
    b4    : (C4, 1) f32        final conv bias (no BN / ReLU on layer 4)
    o_ref : (C4, TN) f32       lane-dense along the points axis
    """
    x = x_ref[...]

    h = jnp.dot(w1_ref[...], x, preferred_element_type=jnp.float32)
    h = jnp.maximum(h * s1_ref[...] + t1_ref[...], 0.0)

    h = jnp.dot(w2_ref[...], h.astype(w2_ref.dtype),
                preferred_element_type=jnp.float32)
    h = jnp.maximum(h * s2_ref[...] + t2_ref[...], 0.0)

    h = jnp.dot(w3_ref[...], h.astype(w3_ref.dtype),
                preferred_element_type=jnp.float32)
    h = jnp.maximum(h * s3_ref[...] + t3_ref[...], 0.0)

    h = jnp.dot(w4_ref[...], h.astype(w4_ref.dtype),
                preferred_element_type=jnp.float32)
    o_ref[...] = (h + b4_ref[...]).astype(o_ref.dtype)


def make_er_estimate_params(key, bottleneck_size=256, output_dim=3):
    """Deterministic synthetic parameters matching the PyTorch module shapes."""
    c1 = bottleneck_size
    c2 = bottleneck_size // 2
    c3 = bottleneck_size // 4
    c4 = output_dim

    keys = jax.random.split(key, 20)
    k = iter(keys)

    def conv(cin, cout):
        # PyTorch Conv1d weight: (cout, cin, 1); store as (cout, cin) + bias (cout,)
        w = jax.random.normal(next(k), (cout, cin), jnp.float32) * 0.02
        b = jax.random.normal(next(k), (cout,), jnp.float32) * 0.01
        return w, b

    def bn(c):
        gamma = 1.0 + 0.1 * jax.random.normal(next(k), (c,), jnp.float32)
        beta = 0.1 * jax.random.normal(next(k), (c,), jnp.float32)
        mean = 0.1 * jax.random.normal(next(k), (c,), jnp.float32)
        var = jnp.abs(jax.random.normal(next(k), (c,), jnp.float32)) + 0.5
        return gamma, beta, mean, var

    params = {
        "conv1": conv(c1, c1), "bn1": bn(c1),
        "conv2": conv(c1, c2), "bn2": bn(c2),
        "conv3": conv(c2, c3), "bn3": bn(c3),
        "conv4": conv(c3, c4),
    }
    return params


def _fold_bn(conv_b, bn_params, eps=1e-5):
    """Fold conv bias + eval-mode BN into per-channel (scale, shift) columns."""
    gamma, beta, mean, var = bn_params
    scale = gamma * jax.lax.rsqrt(var + eps)          # (C_out,)
    shift = (conv_b - mean) * scale + beta            # (C_out,)
    return (scale.reshape(-1, 1).astype(jnp.float32),
            shift.reshape(-1, 1).astype(jnp.float32))


def _pick_tile_n(n, preferred=(2048, 1024, 512, 256, 128)):
    """Largest preferred lane tile that divides N; full extent otherwise."""
    for t in preferred:
        if n % t == 0:
            return t
    return n   # full array extent is always a legal block size


def _vmem_bytes_estimate(c1, c2, c3, c4, tn):
    bf16, f32 = 2, 4
    weights = (c1 * c1 + c1 * c2 + c2 * c3 + c3 * c4) * bf16   # resident
    affine = (2 * c1 + 2 * c2 + 2 * c3 + c4) * f32             # resident
    tiles = 2 * (c1 * tn * bf16 + c4 * tn * f32)               # double-buffered io
    interm = (c1 + c2 + c3) * tn * f32                         # live fp32 temps
    return weights + affine + tiles + interm


def er_estimate_forward(x_ncw, params, *, tile_n=None):
    """x_ncw: (B, C1, N) float32, like the PyTorch module input.  Returns (B, C4, N)."""
    B, C1, N = x_ncw.shape

    w1, b1 = params["conv1"]
    w2, b2 = params["conv2"]
    w3, b3 = params["conv3"]
    w4, b4 = params["conv4"]
    C2, C3, C4 = w2.shape[0], w3.shape[0], w4.shape[0]

    s1, t1 = _fold_bn(b1, params["bn1"])
    s2, t2 = _fold_bn(b2, params["bn2"])
    s3, t3 = _fold_bn(b3, params["bn3"])
    b4r = b4.reshape(-1, 1).astype(jnp.float32)

    # bf16 weights / activations for MXU-native throughput; fp32 accumulation.
    cd = jnp.bfloat16
    x_bf = x_ncw.astype(cd)
    w1c, w2c, w3c, w4c = (w.astype(cd) for w in (w1, w2, w3, w4))

    tn = tile_n if tile_n is not None else _pick_tile_n(N)
    assert N % tn == 0, f"tile_n={tn} must divide N={N}"
    grid = (B, N // tn)

    # Activations: tiled over (batch, points); batch dim squeezed from the view.
    x_spec = pl.BlockSpec((None, C1, tn), lambda b, n: (b, 0, n))
    o_spec = pl.BlockSpec((None, C4, tn), lambda b, n: (b, 0, n))

    # Weights / affines: constant index_map -> stay VMEM-resident across steps.
    def const_spec(arr):
        return pl.BlockSpec(arr.shape, lambda b, n: (0, 0))

    operands = (x_bf,
                w1c, s1, t1,
                w2c, s2, t2,
                w3c, s3, t3,
                w4c, b4r)
    in_specs = [x_spec] + [const_spec(a) for a in operands[1:]]

    flops = 2 * B * N * (C1 * C1 + C1 * C2 + C2 * C3 + C3 * C4)
    bytes_accessed = (x_bf.size * 2
                      + 2 * (w1c.size + w2c.size + w3c.size + w4c.size)
                      + 4 * (s1.size + t1.size + s2.size + t2.size
                             + s3.size + t3.size + b4r.size)
                      + 4 * B * C4 * N)
    cost = pl.CostEstimate(flops=flops, transcendentals=0,
                           bytes_accessed=bytes_accessed)

    vmem_limit = int(min(56 * 1024 * 1024,
                         max(32 * 1024 * 1024,
                             2 * _vmem_bytes_estimate(C1, C2, C3, C4, tn))))

    y = pl.pallas_call(
        _er_estimate_kernel,
        out_shape=jax.ShapeDtypeStruct((B, C4, N), jnp.float32),
        grid=grid,
        in_specs=in_specs,
        out_specs=o_spec,
        compiler_params=pltpu.CompilerParams(
            dimension_semantics=("parallel", "parallel"),
            vmem_limit_bytes=vmem_limit),
        cost_estimate=cost,
    )(*operands)

    return y  # already NCW: (B, C4, N)


def _reference_forward(x_ncw, params, eps=1e-5):
    """Pure-JAX fp32 reference mirroring the PyTorch module (eval-mode BN)."""
    def conv1d(x, w, b):  # x: (B, Cin, N), w: (Cout, Cin)
        return jnp.einsum("bcn,oc->bon", x, w) + b[None, :, None]

    def bn(x, p):
        gamma, beta, mean, var = p
        inv = gamma / jnp.sqrt(var + eps)
        return (x - mean[None, :, None]) * inv[None, :, None] + beta[None, :, None]

    x = jax.nn.relu(bn(conv1d(x_ncw, *params["conv1"]), params["bn1"]))
    x = jax.nn.relu(bn(conv1d(x, *params["conv2"]), params["bn2"]))
    x = jax.nn.relu(bn(conv1d(x, *params["conv3"]), params["bn3"]))
    x = conv1d(x, *params["conv4"])
    return x


if __name__ == "__main__":
    key = jax.random.PRNGKey(0)
    k_param, k_x = jax.random.split(key)

    bottleneck_size = 256   # small stand-in for the default 2500
    output_dim = 3
    B, N = 2, 256           # 2 batches x 256 points; tile_n=128 -> 2x2 grid

    params = make_er_estimate_params(k_param, bottleneck_size, output_dim)
    x = jax.random.normal(k_x, (B, bottleneck_size, N), jnp.float32)

    out = er_estimate_forward(x, params, tile_n=128)
    out = jax.block_until_ready(out)

    ref = _reference_forward(x, params)
    assert out.shape == (B, output_dim, N), out.shape
    max_err = float(jnp.max(jnp.abs(out - ref)))
    # bf16 weights/activations vs fp32 reference -> loosened tolerance.
    assert jnp.allclose(out, ref, atol=3e-2, rtol=3e-2), (
        f"mismatch vs reference, max abs err={max_err}")

    print("KERNEL_OK")
</pallas_src>

<mosaic_0001>
module attributes {stable_mosaic.version = 11 : i64} {
  func.func @_er_estimate_kernel(%arg0: i32, %arg1: i32, %arg2: memref<1x256x128xbf16, #tpu.memory_space<vmem>>, %arg3: memref<256x256xbf16, #tpu.memory_space<vmem>>, %arg4: memref<256x1xf32, #tpu.memory_space<vmem>>, %arg5: memref<256x1xf32, #tpu.memory_space<vmem>>, %arg6: memref<128x256xbf16, #tpu.memory_space<vmem>>, %arg7: memref<128x1xf32, #tpu.memory_space<vmem>>, %arg8: memref<128x1xf32, #tpu.memory_space<vmem>>, %arg9: memref<64x128xbf16, #tpu.memory_space<vmem>>, %arg10: memref<64x1xf32, #tpu.memory_space<vmem>>, %arg11: memref<64x1xf32, #tpu.memory_space<vmem>>, %arg12: memref<3x64xbf16, #tpu.memory_space<vmem>>, %arg13: memref<3x1xf32, #tpu.memory_space<vmem>>, %arg14: memref<1x3x128xf32, #tpu.memory_space<vmem>>) attributes {dimension_semantics = [#tpu.dimension_semantics<parallel>, #tpu.dimension_semantics<parallel>], iteration_bounds = array<i64: 2, 2>, scalar_prefetch = 0 : i64, scratch_operands = 0 : i64, tpu.core_type = #tpu.core_type<tc>, window_params = [{transform_indices = @transform_0, window_bounds = array<i64: 1, 256, 128>}, {pipeline_mode = #tpu.pipeline_mode<synchronous>, transform_indices = @transform_1, window_bounds = array<i64: 256, 256>}, {pipeline_mode = #tpu.pipeline_mode<synchronous>, transform_indices = @transform_2, window_bounds = array<i64: 256, 1>}, {pipeline_mode = #tpu.pipeline_mode<synchronous>, transform_indices = @transform_3, window_bounds = array<i64: 256, 1>}, {pipeline_mode = #tpu.pipeline_mode<synchronous>, transform_indices = @transform_4, window_bounds = array<i64: 128, 256>}, {pipeline_mode = #tpu.pipeline_mode<synchronous>, transform_indices = @transform_5, window_bounds = array<i64: 128, 1>}, {pipeline_mode = #tpu.pipeline_mode<synchronous>, transform_indices = @transform_6, window_bounds = array<i64: 128, 1>}, {pipeline_mode = #tpu.pipeline_mode<synchronous>, transform_indices = @transform_7, window_bounds = array<i64: 64, 128>}, {pipeline_mode = #tpu.pipeline_mode<synchronous>, transform_indices = @transform_8, window_bounds = array<i64: 64, 1>}, {pipeline_mode = #tpu.pipeline_mode<synchronous>, transform_indices = @transform_9, window_bounds = array<i64: 64, 1>}, {pipeline_mode = #tpu.pipeline_mode<synchronous>, transform_indices = @transform_10, window_bounds = array<i64: 3, 64>}, {pipeline_mode = #tpu.pipeline_mode<synchronous>, transform_indices = @transform_11, window_bounds = array<i64: 3, 1>}, {transform_indices = @transform_12, window_bounds = array<i64: 1, 3, 128>}]} {
    %c0 = arith.constant 0 : index
    %c0_0 = arith.constant 0 : index
    %c0_1 = arith.constant 0 : index
    %0 = vector.load %arg2[%c0, %c0_0, %c0_1] : memref<1x256x128xbf16, #tpu.memory_space<vmem>>, vector<1x256x128xbf16>
    %1 = vector.shape_cast %0 : vector<1x256x128xbf16> to vector<256x128xbf16>
    %c0_2 = arith.constant 0 : index
    %c0_3 = arith.constant 0 : index
    %2 = vector.load %arg3[%c0_2, %c0_3] : memref<256x256xbf16, #tpu.memory_space<vmem>>, vector<256x256xbf16>
    %cst = arith.constant dense<0.000000e+00> : vector<256x128xf32>
    %3 = tpu.matmul %2, %1, %cst {dimension_numbers = #tpu.dot_dimension_numbers<[1], [0], [0], [1], [0, 0, 1, 1], [], []>} : vector<256x256xbf16>, vector<256x128xbf16>, vector<256x128xf32> -> vector<256x128xf32>
    %c0_4 = arith.constant 0 : index
    %c0_5 = arith.constant 0 : index
    %4 = vector.load %arg4[%c0_4, %c0_5] : memref<256x1xf32, #tpu.memory_space<vmem>>, vector<256x1xf32>
    %5 = vector.broadcast %4 : vector<256x1xf32> to vector<256x128xf32>
    %6 = arith.mulf %3, %5 : vector<256x128xf32>
    %c0_6 = arith.constant 0 : index
    %c0_7 = arith.constant 0 : index
    %7 = vector.load %arg5[%c0_6, %c0_7] : memref<256x1xf32, #tpu.memory_space<vmem>>, vector<256x1xf32>
    %8 = vector.broadcast %7 : vector<256x1xf32> to vector<256x128xf32>
    %9 = arith.addf %6, %8 : vector<256x128xf32>
    %cst_8 = arith.constant 0.000000e+00 : f32
    %10 = vector.broadcast %cst_8 : f32 to vector<256x128xf32>
    %11 = arith.maximumf %9, %10 : vector<256x128xf32>
    %c0_9 = arith.constant 0 : index
    %c0_10 = arith.constant 0 : index
    %12 = vector.load %arg6[%c0_9, %c0_10] : memref<128x256xbf16, #tpu.memory_space<vmem>>, vector<128x256xbf16>
    %13 = arith.truncf %11 : vector<256x128xf32> to vector<256x128xbf16>
    %cst_11 = arith.constant dense<0.000000e+00> : vector<128x128xf32>
    %14 = tpu.matmul %12, %13, %cst_11 {dimension_numbers = #tpu.dot_dimension_numbers<[1], [0], [0], [1], [0, 0, 1, 1], [], []>} : vector<128x256xbf16>, vector<256x128xbf16>, vector<128x128xf32> -> vector<128x128xf32>
    %c0_12 = arith.constant 0 : index
    %c0_13 = arith.constant 0 : index
    %15 = vector.load %arg7[%c0_12, %c0_13] : memref<128x1xf32, #tpu.memory_space<vmem>>, vector<128x1xf32>
    %16 = vector.broadcast %15 : vector<128x1xf32> to vector<128x128xf32>
    %17 = arith.mulf %14, %16 : vector<128x128xf32>
    %c0_14 = arith.constant 0 : index
    %c0_15 = arith.constant 0 : index
    %18 = vector.load %arg8[%c0_14, %c0_15] : memref<128x1xf32, #tpu.memory_space<vmem>>, vector<128x1xf32>
    %19 = vector.broadcast %18 : vector<128x1xf32> to vector<128x128xf32>
    %20 = arith.addf %17, %19 : vector<128x128xf32>
    %cst_16 = arith.constant 0.000000e+00 : f32
    %21 = vector.broadcast %cst_16 : f32 to vector<128x128xf32>
    %22 = arith.maximumf %20, %21 : vector<128x128xf32>
    %c0_17 = arith.constant 0 : index
    %c0_18 = arith.constant 0 : index
    %23 = vector.load %arg9[%c0_17, %c0_18] : memref<64x128xbf16, #tpu.memory_space<vmem>>, vector<64x128xbf16>
    %24 = arith.truncf %22 : vector<128x128xf32> to vector<128x128xbf16>
    %cst_19 = arith.constant dense<0.000000e+00> : vector<64x128xf32>
    %25 = tpu.matmul %23, %24, %cst_19 {dimension_numbers = #tpu.dot_dimension_numbers<[1], [0], [0], [1], [0, 0, 1, 1], [], []>} : vector<64x128xbf16>, vector<128x128xbf16>, vector<64x128xf32> -> vector<64x128xf32>
    %c0_20 = arith.constant 0 : index
    %c0_21 = arith.constant 0 : index
    %26 = vector.load %arg10[%c0_20, %c0_21] : memref<64x1xf32, #tpu.memory_space<vmem>>, vector<64x1xf32>
    %27 = vector.broadcast %26 : vector<64x1xf32> to vector<64x128xf32>
    %28 = arith.mulf %25, %27 : vector<64x128xf32>
    %c0_22 = arith.constant 0 : index
    %c0_23 = arith.constant 0 : index
    %29 = vector.load %arg11[%c0_22, %c0_23] : memref<64x1xf32, #tpu.memory_space<vmem>>, vector<64x1xf32>
    %30 = vector.broadcast %29 : vector<64x1xf32> to vector<64x128xf32>
    %31 = arith.addf %28, %30 : vector<64x128xf32>
    %cst_24 = arith.constant 0.000000e+00 : f32
    %32 = vector.broadcast %cst_24 : f32 to vector<64x128xf32>
    %33 = arith.maximumf %31, %32 : vector<64x128xf32>
    %c0_25 = arith.constant 0 : index
    %c0_26 = arith.constant 0 : index
    %34 = vector.load %arg12[%c0_25, %c0_26] : memref<3x64xbf16, #tpu.memory_space<vmem>>, vector<3x64xbf16>
    %35 = arith.truncf %33 : vector<64x128xf32> to vector<64x128xbf16>
    %cst_27 = arith.constant dense<0.000000e+00> : vector<3x128xf32>
    %36 = tpu.matmul %34, %35, %cst_27 {dimension_numbers = #tpu.dot_dimension_numbers<[1], [0], [0], [1], [0, 0, 1, 1], [], []>} : vector<3x64xbf16>, vector<64x128xbf16>, vector<3x128xf32> -> vector<3x128xf32>
    %c0_28 = arith.constant 0 : index
    %c0_29 = arith.constant 0 : index
    %37 = vector.load %arg13[%c0_28, %c0_29] : memref<3x1xf32, #tpu.memory_space<vmem>>, vector<3x1xf32>
    %38 = vector.broadcast %37 : vector<3x1xf32> to vector<3x128xf32>
    %39 = arith.addf %36, %38 : vector<3x128xf32>
    %c0_30 = arith.constant 0 : index
    %c0_31 = arith.constant 0 : index
    %c0_32 = arith.constant 0 : index
    %40 = vector.load %arg14[%c0_30, %c0_31, %c0_32] : memref<1x3x128xf32, #tpu.memory_space<vmem>>, vector<1x3x128xf32>
    %41 = vector.shape_cast %40 : vector<1x3x128xf32> to vector<3x128xf32>
    %42 = vector.shape_cast %39 : vector<3x128xf32> to vector<1x3x128xf32>
    tpu.vector_store %arg14[%c0_30, %c0_31, %c0_32], %42 {strides = array<i32>} : memref<1x3x128xf32, #tpu.memory_space<vmem>>, vector<1x3x128xf32>,
    return
  }
  func.func @transform_0(%arg0: i32, %arg1: i32) -> (i32, i32, i32) {
    %c0_i32 = arith.constant 0 : i32
    %c0_i32_0 = arith.constant 0 : i32
    return %arg0, %c0_i32, %arg1 : i32, i32, i32
  }
  func.func @transform_1(%arg0: i32, %arg1: i32) -> (i32, i32) {
    %c0_i32 = arith.constant 0 : i32
    %c0_i32_0 = arith.constant 0 : i32
    %c0_i32_1 = arith.constant 0 : i32
    return %c0_i32, %c0_i32_0 : i32, i32
  }
  func.func @transform_2(%arg0: i32, %arg1: i32) -> (i32, i32) {
    %c0_i32 = arith.constant 0 : i32
    %c0_i32_0 = arith.constant 0 : i32
    %c0_i32_1 = arith.constant 0 : i32
    return %c0_i32, %c0_i32_0 : i32, i32
  }
  func.func @transform_3(%arg0: i32, %arg1: i32) -> (i32, i32) {
    %c0_i32 = arith.constant 0 : i32
    %c0_i32_0 = arith.constant 0 : i32
    %c0_i32_1 = arith.constant 0 : i32
    return %c0_i32, %c0_i32_0 : i32, i32
  }
  func.func @transform_4(%arg0: i32, %arg1: i32) -> (i32, i32) {
    %c0_i32 = arith.constant 0 : i32
    %c0_i32_0 = arith.constant 0 : i32
    %c0_i32_1 = arith.constant 0 : i32
    return %c0_i32, %c0_i32_0 : i32, i32
  }
  func.func @transform_5(%arg0: i32, %arg1: i32) -> (i32, i32) {
    %c0_i32 = arith.constant 0 : i32
    %c0_i32_0 = arith.constant 0 : i32
    %c0_i32_1 = arith.constant 0 : i32
    return %c0_i32, %c0_i32_0 : i32, i32
  }
  func.func @transform_6(%arg0: i32, %arg1: i32) -> (i32, i32) {
    %c0_i32 = arith.constant 0 : i32
    %c0_i32_0 = arith.constant 0 : i32
    %c0_i32_1 = arith.constant 0 : i32
    return %c0_i32, %c0_i32_0 : i32, i32
  }
  func.func @transform_7(%arg0: i32, %arg1: i32) -> (i32, i32) {
    %c0_i32 = arith.constant 0 : i32
    %c0_i32_0 = arith.constant 0 : i32
    %c0_i32_1 = arith.constant 0 : i32
    return %c0_i32, %c0_i32_0 : i32, i32
  }
  func.func @transform_8(%arg0: i32, %arg1: i32) -> (i32, i32) {
    %c0_i32 = arith.constant 0 : i32
    %c0_i32_0 = arith.constant 0 : i32
    %c0_i32_1 = arith.constant 0 : i32
    return %c0_i32, %c0_i32_0 : i32, i32
  }
  func.func @transform_9(%arg0: i32, %arg1: i32) -> (i32, i32) {
    %c0_i32 = arith.constant 0 : i32
    %c0_i32_0 = arith.constant 0 : i32
    %c0_i32_1 = arith.constant 0 : i32
    return %c0_i32, %c0_i32_0 : i32, i32
  }
  func.func @transform_10(%arg0: i32, %arg1: i32) -> (i32, i32) {
    %c0_i32 = arith.constant 0 : i32
    %c0_i32_0 = arith.constant 0 : i32
    %c0_i32_1 = arith.constant 0 : i32
    return %c0_i32, %c0_i32_0 : i32, i32
  }
  func.func @transform_11(%arg0: i32, %arg1: i32) -> (i32, i32) {
    %c0_i32 = arith.constant 0 : i32
    %c0_i32_0 = arith.constant 0 : i32
    %c0_i32_1 = arith.constant 0 : i32
    return %c0_i32, %c0_i32_0 : i32, i32
  }
  func.func @transform_12(%arg0: i32, %arg1: i32) -> (i32, i32, i32) {
    %c0_i32 = arith.constant 0 : i32
    %c0_i32_0 = arith.constant 0 : i32
    return %arg0, %c0_i32, %arg1 : i32, i32, i32
  }
}

</mosaic_0001>

<llo_original>
// kernel: tpu_custom_call.1
$region0: #{tpu_custom_call.1}
  #allocation0 [shape = 'u32[]', space=smem, size = 0x4, offset = 0x4, fixed_abs, tag = 'smem constant byte address 0x4 - core index']
  #allocation1 [shape = 'u32[144,128]{1,0:T(1,128)}', space=vmem, size = 0x12000, scoped, tag = 'internal scratch']
  %s0 = inlined_call_operand.vmem [shape: bf16[2,256,256], index: 0, kind: input, shape index: {}]
  %s1 = inlined_call_operand.vmem [shape: bf16[256,256], index: 1, kind: input, shape index: {}]
  %s2 = inlined_call_operand.vmem [shape: f32[256,1], index: 2, kind: input, shape index: {}]
  %s3 = inlined_call_operand.vmem [shape: f32[256,1], index: 3, kind: input, shape index: {}]
  %s4 = inlined_call_operand.vmem [shape: bf16[128,256], index: 4, kind: input, shape index: {}]
  %s5 = inlined_call_operand.vmem [shape: f32[128,1], index: 5, kind: input, shape index: {}]
  %s6 = inlined_call_operand.vmem [shape: f32[128,1], index: 6, kind: input, shape index: {}]
  %s7 = inlined_call_operand.hbm [shape: bf16[64,128], index: 7, kind: input, shape index: {}]
  %s8 = inlined_call_operand.vmem [shape: f32[64,1], index: 8, kind: input, shape index: {}]
  %s9 = inlined_call_operand.vmem [shape: f32[64,1], index: 9, kind: input, shape index: {}]
  %s10 = inlined_call_operand.vmem [shape: bf16[3,64], index: 10, kind: input, shape index: {}]
  %s11 = inlined_call_operand.vmem [shape: f32[3,1], index: 11, kind: input, shape index: {}]
  %s12 = inlined_call_operand.vmem [shape: f32[2,3,256], index: 12, kind: output, shape index: {}]
  %s13 = sld [smem:[#allocation0]]
  $region126: #{tpu_custom_call.1} parent=0
    _
  %s15 = ssub.s32 1, %s13
  %s16 = scalar_select 0, %s15, %s13
  $region1: #{tpu_custom_call.1} parent=0
    #allocation2 [shape = 'u8[131072]{0}', space=vmem, size = 0x20000, scoped, tag = 'input window, operand 0']
    #allocation3 [shape = 'u8[16384]{0}', space=vmem, size = 0x4000, scoped, tag = 'input window, operand 7, single buffered']
    #allocation4 [shape = 's32[2]{0}', space=sflag, size = 0x8, scoped, tag = 'scoped memory for tpu_custom_call.1']
    %17 = vsyncpa [#allocation4], 0
    loop: start=0, step=1, limit=6
    $region2: #{tpu_custom_call.1} parent=1 // loop_pre_header
      _
    $region3: #{tpu_custom_call.1} parent=1 // loop_header
      %s19 = sphi 0, %s23
      %p20 = scmp.ge.s32.totalorder %s19, 6
      %s26 = sphi 0, %s38
      %s27 = sphi 0, %s34
      %s28 = sphi 0, %s26
      %s29 = sphi 0, %s27
      %s30 = sphi 0, %s28
      %s31 = sphi 0, %s29
      %s43 = sphi 0, %s45
      %s46 = sphi 0, %s43
      %s47 = sphi 0, %s46
      %s63 = sphi 0, %s47
      %s67 = sphi 0, %s67
      %s69 = sphi 0, %s67
      %s70 = sphi 0, %s69
      %s84 = sphi 0, %s70
      %s88 = sphi 0, %s88
      %s90 = sphi 0, %s88
      %s91 = sphi 0, %s90
      %s105 = sphi 0, %s91
      %s109 = sphi 0, %s109
      %s111 = sphi 0, %s109
      %s112 = sphi 0, %s111
      %s126 = sphi 0, %s112
      %s130 = sphi 0, %s130
      %s132 = sphi 0, %s130
      %s133 = sphi 0, %s132
      %s147 = sphi 0, %s133
      %s151 = sphi 0, %s151
      %s153 = sphi 0, %s151
      %s154 = sphi 0, %s153
      %s168 = sphi 0, %s154
      %s172 = sphi 0, %s172
      %s174 = sphi 0, %s172
      %s175 = sphi 0, %s174
      %s189 = sphi 0, %s175
      %s193 = sphi 0, %s193
      %s195 = sphi 0, %s193
      %s196 = sphi 0, %s195
      %s210 = sphi 0, %s196
      %s214 = sphi 0, %s214
      %s216 = sphi 0, %s214
      %s217 = sphi 0, %s216
      %s231 = sphi 0, %s217
      %s235 = sphi 0, %s235
      %s237 = sphi 0, %s235
      %s238 = sphi 0, %s237
      %s252 = sphi 0, %s238
      %s256 = sphi 0, %s256
      %s258 = sphi 0, %s256
      %s259 = sphi 0, %s258
      %s273 = sphi 0, %s259
      %s277 = sphi 0, %s277
      %s279 = sphi 0, %s277
      %s280 = sphi 0, %s279
      %s294 = sphi 0, %s280
      %s302 = sphi 0, %s304
      %s305 = sphi 0, %s302
      %s306 = sphi 0, %s305
      %s322 = sphi 0, %s306
    $region4: #{tpu_custom_call.1} parent=1 // loop_header_branch
      %22 = sbr.rel (%p20) target = $region8
    $region5: #{tpu_custom_call.1} parent=1 // loop_body
      %s24 = ssub.s32 %s19, 1
      %s25 = ssub.s32 %s19, 2
      %s32 = sadd.s32 1, %s27
      %p33 = scmp.ge.s32.totalorder %s32, 2
      %s34 = scalar_select %p33, 0, %s32
      %s35 = sadd.s32 1, %s26
      %s36 = scalar_select %p33, %s35, %s26
      %p37 = scmp.ge.s32.totalorder %s36, 2
      %s38 = scalar_select %p37, 0, %s36
      %s39 = ssub.s32 %s26, %s38
      %s40 = ssub.s32 %s27, %s34
      %s41 = sor.u32 %s39, %s40
      %p42 = scmp.eq.s32.totalorder %s41, 0
      %s44 = sadd.s32 %s43, 1
      %s45 = scalar_select %p42, %s43, %s44
      %p48 = pneg %p42
      %p49 = scmp.eq.s32.totalorder %s19, 3
      %p50 = por %p48, %p49
      %p51 = scmp.ne.s32.totalorder %s43, %s46
      %p52 = scmp.eq.s32.totalorder %s19, 0
      %p53 = por %p51, %p52
      %p54 = scmp.ne.s32.totalorder %s43, %s46
      %p55 = scmp.eq.s32.totalorder %s24, 3
      %p56 = por %p54, %p55
      %p57 = scmp.ne.s32.totalorder %s46, %s47
      %p58 = scmp.eq.s32.totalorder %s24, 0
      %p59 = por %p57, %p58
      %p60 = scmp.ne.s32.totalorder %s46, %s47
      %p61 = scmp.eq.s32.totalorder %s25, 3
      %p62 = por %p60, %p61
      %p64 = scmp.ne.s32.totalorder %s47, %s63
      %p65 = scmp.eq.s32.totalorder %s25, 0
      %p66 = por %p64, %p65
      %s68 = sadd.s32 %s67, 1
      %p71 = scmp.eq.s32.totalorder %s19, 3
      %p72 = scmp.ne.s32.totalorder %s67, %s69
      %p73 = scmp.eq.s32.totalorder %s19, 0
      %p74 = por %p72, %p73
      %p75 = scmp.ne.s32.totalorder %s67, %s69
      %p76 = scmp.eq.s32.totalorder %s24, 3
      %p77 = por %p75, %p76
      %p78 = scmp.ne.s32.totalorder %s69, %s70
      %p79 = scmp.eq.s32.totalorder %s24, 0
      %p80 = por %p78, %p79
      %p81 = scmp.ne.s32.totalorder %s69, %s70
      %p82 = scmp.eq.s32.totalorder %s25, 3
      %p83 = por %p81, %p82
      %p85 = scmp.ne.s32.totalorder %s70, %s84
      %p86 = scmp.eq.s32.totalorder %s25, 0
      %p87 = por %p85, %p86
      %s89 = sadd.s32 %s88, 1
      %p92 = scmp.eq.s32.totalorder %s19, 3
      %p93 = scmp.ne.s32.totalorder %s88, %s90
      %p94 = scmp.eq.s32.totalorder %s19, 0
      %p95 = por %p93, %p94
      %p96 = scmp.ne.s32.totalorder %s88, %s90
      %p97 = scmp.eq.s32.totalorder %s24, 3
      %p98 = por %p96, %p97
      %p99 = scmp.ne.s32.totalorder %s90, %s91
      %p100 = scmp.eq.s32.totalorder %s24, 0
      %p101 = por %p99, %p100
      %p102 = scmp.ne.s32.totalorder %s90, %s91
      %p103 = scmp.eq.s32.totalorder %s25, 3
      %p104 = por %p102, %p103
      %p106 = scmp.ne.s32.totalorder %s91, %s105
      %p107 = scmp.eq.s32.totalorder %s25, 0
      %p108 = por %p106, %p107
      %s110 = sadd.s32 %s109, 1
      %p113 = scmp.eq.s32.totalorder %s19, 3
      %p114 = scmp.ne.s32.totalorder %s109, %s111
      %p115 = scmp.eq.s32.totalorder %s19, 0
      %p116 = por %p114, %p115
      %p117 = scmp.ne.s32.totalorder %s109, %s111
      %p118 = scmp.eq.s32.totalorder %s24, 3
      %p119 = por %p117, %p118
      %p120 = scmp.ne.s32.totalorder %s111, %s112
      %p121 = scmp.eq.s32.totalorder %s24, 0
      %p122 = por %p120, %p121
      %p123 = scmp.ne.s32.totalorder %s111, %s112
      %p124 = scmp.eq.s32.totalorder %s25, 3
      %p125 = por %p123, %p124
      %p127 = scmp.ne.s32.totalorder %s112, %s126
      %p128 = scmp.eq.s32.totalorder %s25, 0
      %p129 = por %p127, %p128
      %s131 = sadd.s32 %s130, 1
      %p134 = scmp.eq.s32.totalorder %s19, 3
      %p135 = scmp.ne.s32.totalorder %s130, %s132
      %p136 = scmp.eq.s32.totalorder %s19, 0
      %p137 = por %p135, %p136
      %p138 = scmp.ne.s32.totalorder %s130, %s132
      %p139 = scmp.eq.s32.totalorder %s24, 3
      %p140 = por %p138, %p139
      %p141 = scmp.ne.s32.totalorder %s132, %s133
      %p142 = scmp.eq.s32.totalorder %s24, 0
      %p143 = por %p141, %p142
      %p144 = scmp.ne.s32.totalorder %s132, %s133
      %p145 = scmp.eq.s32.totalorder %s25, 3
      %p146 = por %p144, %p145
      %p148 = scmp.ne.s32.totalorder %s133, %s147
      %p149 = scmp.eq.s32.totalorder %s25, 0
      %p150 = por %p148, %p149
      %s152 = sadd.s32 %s151, 1
      %p155 = scmp.eq.s32.totalorder %s19, 3
      %p156 = scmp.ne.s32.totalorder %s151, %s153
      %p157 = scmp.eq.s32.totalorder %s19, 0
      %p158 = por %p156, %p157
      %p159 = scmp.ne.s32.totalorder %s151, %s153
      %p160 = scmp.eq.s32.totalorder %s24, 3
      %p161 = por %p159, %p160
      %p162 = scmp.ne.s32.totalorder %s153, %s154
      %p163 = scmp.eq.s32.totalorder %s24, 0
      %p164 = por %p162, %p163
      %p165 = scmp.ne.s32.totalorder %s153, %s154
      %p166 = scmp.eq.s32.totalorder %s25, 3
      %p167 = por %p165, %p166
      %p169 = scmp.ne.s32.totalorder %s154, %s168
      %p170 = scmp.eq.s32.totalorder %s25, 0
      %p171 = por %p169, %p170
      %s173 = sadd.s32 %s172, 1
      %p176 = scmp.eq.s32.totalorder %s19, 3
      %p177 = scmp.ne.s32.totalorder %s172, %s174
      %p178 = scmp.eq.s32.totalorder %s19, 0
      %p179 = por %p177, %p178
      %p180 = scmp.ne.s32.totalorder %s172, %s174
      %p181 = scmp.eq.s32.totalorder %s24, 3
      %p182 = por %p180, %p181
      %p183 = scmp.ne.s32.totalorder %s174, %s175
      %p184 = scmp.eq.s32.totalorder %s24, 0
      %p185 = por %p183, %p184
      %p186 = scmp.ne.s32.totalorder %s174, %s175
      %p187 = scmp.eq.s32.totalorder %s25, 3
      %p188 = por %p186, %p187
      %p190 = scmp.ne.s32.totalorder %s175, %s189
      %p191 = scmp.eq.s32.totalorder %s25, 0
      %p192 = por %p190, %p191
      %s194 = sadd.s32 %s193, 1
      %p197 = scmp.eq.s32.totalorder %s19, 3
      %p198 = scmp.ne.s32.totalorder %s193, %s195
      %p199 = scmp.eq.s32.totalorder %s19, 0
      %p200 = por %p198, %p199
      %p201 = scmp.ne.s32.totalorder %s193, %s195
      %p202 = scmp.eq.s32.totalorder %s24, 3
      %p203 = por %p201, %p202
      %p204 = scmp.ne.s32.totalorder %s195, %s196
      %p205 = scmp.eq.s32.totalorder %s24, 0
      %p206 = por %p204, %p205
      %p207 = scmp.ne.s32.totalorder %s195, %s196
      %p208 = scmp.eq.s32.totalorder %s25, 3
      %p209 = por %p207, %p208
      %p211 = scmp.ne.s32.totalorder %s196, %s210
      %p212 = scmp.eq.s32.totalorder %s25, 0
      %p213 = por %p211, %p212
      %s215 = sadd.s32 %s214, 1
      %p218 = scmp.eq.s32.totalorder %s19, 3
      %p219 = scmp.ne.s32.totalorder %s214, %s216
      %p220 = scmp.eq.s32.totalorder %s19, 0
      %p221 = por %p219, %p220
      %p222 = scmp.ne.s32.totalorder %s214, %s216
      %p223 = scmp.eq.s32.totalorder %s24, 3
      %p224 = por %p222, %p223
      %p225 = scmp.ne.s32.totalorder %s216, %s217
      %p226 = scmp.eq.s32.totalorder %s24, 0
      %p227 = por %p225, %p226
      %p228 = scmp.ne.s32.totalorder %s216, %s217
      %p229 = scmp.eq.s32.totalorder %s25, 3
      %p230 = por %p228, %p229
      %p232 = scmp.ne.s32.totalorder %s217, %s231
      %p233 = scmp.eq.s32.totalorder %s25, 0
      %p234 = por %p232, %p233
      %s236 = sadd.s32 %s235, 1
      %p239 = scmp.eq.s32.totalorder %s19, 3
      %p240 = scmp.ne.s32.totalorder %s235, %s237
      %p241 = scmp.eq.s32.totalorder %s19, 0
      %p242 = por %p240, %p241
      %p243 = scmp.ne.s32.totalorder %s235, %s237
      %p244 = scmp.eq.s32.totalorder %s24, 3
      %p245 = por %p243, %p244
      %p246 = scmp.ne.s32.totalorder %s237, %s238
      %p247 = scmp.eq.s32.totalorder %s24, 0
      %p248 = por %p246, %p247
      %p249 = scmp.ne.s32.totalorder %s237, %s238
      %p250 = scmp.eq.s32.totalorder %s25, 3
      %p251 = por %p249, %p250
      %p253 = scmp.ne.s32.totalorder %s238, %s252
      %p254 = scmp.eq.s32.totalorder %s25, 0
      %p255 = por %p253, %p254
      %s257 = sadd.s32 %s256, 1
      %p260 = scmp.eq.s32.totalorder %s19, 3
      %p261 = scmp.ne.s32.totalorder %s256, %s258
      %p262 = scmp.eq.s32.totalorder %s19, 0
      %p263 = por %p261, %p262
      %p264 = scmp.ne.s32.totalorder %s256, %s258
      %p265 = scmp.eq.s32.totalorder %s24, 3
      %p266 = por %p264, %p265
      %p267 = scmp.ne.s32.totalorder %s258, %s259
      %p268 = scmp.eq.s32.totalorder %s24, 0
      %p269 = por %p267, %p268
      %p270 = scmp.ne.s32.totalorder %s258, %s259
      %p271 = scmp.eq.s32.totalorder %s25, 3
      %p272 = por %p270, %p271
      %p274 = scmp.ne.s32.totalorder %s259, %s273
      %p275 = scmp.eq.s32.totalorder %s25, 0
      %p276 = por %p274, %p275
      %s278 = sadd.s32 %s277, 1
      %p281 = scmp.eq.s32.totalorder %s19, 3
      %p282 = scmp.ne.s32.totalorder %s277, %s279
      %p283 = scmp.eq.s32.totalorder %s19, 0
      %p284 = por %p282, %p283
      %p285 = scmp.ne.s32.totalorder %s277, %s279
      %p286 = scmp.eq.s32.totalorder %s24, 3
      %p287 = por %p285, %p286
      %p288 = scmp.ne.s32.totalorder %s279, %s280
      %p289 = scmp.eq.s32.totalorder %s24, 0
      %p290 = por %p288, %p289
      %p291 = scmp.ne.s32.totalorder %s279, %s280
      %p292 = scmp.eq.s32.totalorder %s25, 3
      %p293 = por %p291, %p292
      %p295 = scmp.ne.s32.totalorder %s280, %s294
      %p296 = scmp.eq.s32.totalorder %s25, 0
      %p297 = por %p295, %p296
      %s298 = ssub.s32 %s26, %s38
      %s299 = ssub.s32 %s27, %s34
      %s300 = sor.u32 %s298, %s299
      %p301 = scmp.eq.s32.totalorder %s300, 0
      %s303 = sadd.s32 %s302, 1
      %s304 = scalar_select %p301, %s302, %s303
      %p307 = pneg %p301
      %p308 = scmp.eq.s32.totalorder %s19, 3
      %p309 = por %p307, %p308
      %p310 = scmp.ne.s32.totalorder %s302, %s305
      %p311 = scmp.eq.s32.totalorder %s19, 0
      %p312 = por %p310, %p311
      %p313 = scmp.ne.s32.totalorder %s302, %s305
      %p314 = scmp.eq.s32.totalorder %s24, 3
      %p315 = por %p313, %p314
      %p316 = scmp.ne.s32.totalorder %s305, %s306
      %p317 = scmp.eq.s32.totalorder %s24, 0
      %p318 = por %p316, %p317
      %p319 = scmp.ne.s32.totalorder %s305, %s306
      %p320 = scmp.eq.s32.totalorder %s25, 3
      %p321 = por %p319, %p320
      %p323 = scmp.ne.s32.totalorder %s306, %s322
      %p324 = scmp.eq.s32.totalorder %s25, 0
      %p325 = por %p323, %p324
      %p326 = scmp.le.s32.totalorder 1, %s19
      %p327 = scmp.lt.s32.totalorder %s19, 5
      %p328 = pnand %p326, %p327
      %p329 = pneg %p328
      // Predicated region
      $region9: #{tpu_custom_call.1} parent=5 // pred_check
        _
      $region10: #{tpu_custom_call.1} parent=5 // pred_check_branch
        %331 = sbr.rel (%p328) target = $region12
      $region11: #{tpu_custom_call.1} parent=5 // pred_region
        %s332 = ssub.s32 %s19, 1
        // Predicated region
        $region13: #{tpu_custom_call.1} parent=11 // pred_check
          %p333 = pneg %p80
        $region14: #{tpu_custom_call.1} parent=11 // pred_check_branch
          %335 = sbr.rel (%p333) target = $region16
        $region15: #{tpu_custom_call.1} parent=11 // pred_region
          _
        $region16: #{tpu_custom_call.1} parent=11 // pred_fallthru
          _
        // Predicated region
        $region17: #{tpu_custom_call.1} parent=11 // pred_check
          %p336 = pneg %p101
        $region18: #{tpu_custom_call.1} parent=11 // pred_check_branch
          %338 = sbr.rel (%p336) target = $region20
        $region19: #{tpu_custom_call.1} parent=11 // pred_region
          _
        $region20: #{tpu_custom_call.1} parent=11 // pred_fallthru
          _
        // Predicated region
        $region21: #{tpu_custom_call.1} parent=11 // pred_check
          %p339 = pneg %p122
        $region22: #{tpu_custom_call.1} parent=11 // pred_check_branch
          %341 = sbr.rel (%p339) target = $region24
        $region23: #{tpu_custom_call.1} parent=11 // pred_region
          _
        $region24: #{tpu_custom_call.1} parent=11 // pred_fallthru
          _
        // Predicated region
        $region25: #{tpu_custom_call.1} parent=11 // pred_check
          %p342 = pneg %p143
        $region26: #{tpu_custom_call.1} parent=11 // pred_check_branch
          %344 = sbr.rel (%p342) target = $region28
        $region27: #{tpu_custom_call.1} parent=11 // pred_region
          _
        $region28: #{tpu_custom_call.1} parent=11 // pred_fallthru
          _
        // Predicated region
        $region29: #{tpu_custom_call.1} parent=11 // pred_check
          %p345 = pneg %p164
        $region30: #{tpu_custom_call.1} parent=11 // pred_check_branch
          %347 = sbr.rel (%p345) target = $region32
        $region31: #{tpu_custom_call.1} parent=11 // pred_region
          _
        $region32: #{tpu_custom_call.1} parent=11 // pred_fallthru
          _
        // Predicated region
        $region33: #{tpu_custom_call.1} parent=11 // pred_check
          %p348 = pneg %p185
        $region34: #{tpu_custom_call.1} parent=11 // pred_check_branch
          %350 = sbr.rel (%p348) target = $region36
        $region35: #{tpu_custom_call.1} parent=11 // pred_region
          _
        $region36: #{tpu_custom_call.1} parent=11 // pred_fallthru
          _
        // Predicated region
        $region37: #{tpu_custom_call.1} parent=11 // pred_check
          %p351 = pneg %p206
        $region38: #{tpu_custom_call.1} parent=11 // pred_check_branch
          %353 = sbr.rel (%p351) target = $region40
        $region39: #{tpu_custom_call.1} parent=11 // pred_region
          %s355 = ssub.s32 512, 512
          %356 = vsyncadd [#allocation4], %s355
          %s357 = sshll.u32 [#allocation3], 4
          %s358 = int_to_ptr.vmem [resolvable:$true] %s357
          %363 = dma.hbm_to_vmem [thread:$0]  %s7, 512, %s358, [#allocation4], 64, 64, 4
        $region40: #{tpu_custom_call.1} parent=11 // pred_fallthru
          _
        // Predicated region
        $region41: #{tpu_custom_call.1} parent=11 // pred_check
          %p364 = pneg %p227
        $region42: #{tpu_custom_call.1} parent=11 // pred_check_branch
          %366 = sbr.rel (%p364) target = $region44
        $region43: #{tpu_custom_call.1} parent=11 // pred_region
          _
        $region44: #{tpu_custom_call.1} parent=11 // pred_fallthru
          _
        // Predicated region
        $region45: #{tpu_custom_call.1} parent=11 // pred_check
          %p367 = pneg %p248
        $region46: #{tpu_custom_call.1} parent=11 // pred_check_branch
          %369 = sbr.rel (%p367) target = $region48
        $region47: #{tpu_custom_call.1} parent=11 // pred_region
          _
        $region48: #{tpu_custom_call.1} parent=11 // pred_fallthru
          _
        // Predicated region
        $region49: #{tpu_custom_call.1} parent=11 // pred_check
          %p370 = pneg %p269
        $region50: #{tpu_custom_call.1} parent=11 // pred_check_branch
          %372 = sbr.rel (%p370) target = $region52
        $region51: #{tpu_custom_call.1} parent=11 // pred_region
          _
        $region52: #{tpu_custom_call.1} parent=11 // pred_fallthru
          _
        // Predicated region
        $region53: #{tpu_custom_call.1} parent=11 // pred_check
          %p373 = pneg %p290
        $region54: #{tpu_custom_call.1} parent=11 // pred_check_branch
          %375 = sbr.rel (%p373) target = $region56
        $region55: #{tpu_custom_call.1} parent=11 // pred_region
          _
        $region56: #{tpu_custom_call.1} parent=11 // pred_fallthru
          _
      $region12: #{tpu_custom_call.1} parent=5 // pred_fallthru
        _
      %p376 = scmp.lt.s32.totalorder %s19, 4
      // Predicated region
      $region57: #{tpu_custom_call.1} parent=5 // pred_check
        %p377 = pneg %p376
      $region58: #{tpu_custom_call.1} parent=5 // pred_check_branch
        %379 = sbr.rel (%p377) target = $region60
      $region59: #{tpu_custom_call.1} parent=5 // pred_region
        // Predicated region
        $region61: #{tpu_custom_call.1} parent=59 // pred_check
          %p380 = pneg %p53
        $region62: #{tpu_custom_call.1} parent=59 // pred_check_branch
          %382 = sbr.rel (%p380) target = $region64
        $region63: #{tpu_custom_call.1} parent=59 // pred_region
          %s383 = sand.u32 %s43, 1
          %s384 = sand.u32 %s43, 1
          %s385 = smul.addr %s384, 128
          %s386 = scalar_lea.vmem [#allocation2], %s385
          %s387 = smul.addr %s26, 64
          %s388 = sadd.s32 %s27, %s387
          %s389 = smul.addr %s388, 4
          %s390 = scalar_lea.vmem %s0, %s389
          // Predicated region
          $region65: #{tpu_custom_call.1} parent=63 // pred_check
            _
          $region66: #{tpu_custom_call.1} parent=63 // pred_check_branch
            %392 = sbr.rel (0) target = $region68
          $region67: #{tpu_custom_call.1} parent=63 // pred_region
            // Predicated region
            $region69: #{tpu_custom_call.1} parent=67 // pred_check
              _
            $region70: #{tpu_custom_call.1} parent=67 // pred_check_branch
              %394 = sbr.rel target = $region72
            $region71: #{tpu_custom_call.1} parent=67 // pred_region
              // Predicated region
              $region84: #{tpu_custom_call.1} parent=71 // pred_check
                _
              $region85: #{tpu_custom_call.1} parent=71 // pred_check_branch
                %471 = sbr.rel (0) target = $region87
              $region86: #{tpu_custom_call.1} parent=71 // pred_region
                loop: start=0, step=1, limit=1
                $region88: #{tpu_custom_call.1} parent=86 // loop_pre_header
                  _
                $region89: #{tpu_custom_call.1} parent=86 // loop_header
                  %s473 = sphi 0, %s477
                  %p474 = scmp.ge.s32.totalorder %s473, 1
                  %s478 = sphi %s390, %s390
                  %s479 = sphi %s386, %s386
                $region90: #{tpu_custom_call.1} parent=86 // loop_header_branch
                  %476 = sbr.rel (%p474) target = $region94
                $region91: #{tpu_custom_call.1} parent=86 // loop_body
                  _
                $region92: #{tpu_custom_call.1} parent=86 // loop_footer
                  %s477 = sadd.s32 1, %s473
                $region93: #{tpu_custom_call.1} parent=86 // loop_footer_branch
                  %472 = sbr.rel target = $region89
                $region94: #{tpu_custom_call.1} parent=86 // loop_exit
                  _
                loop: start=0, step=1, limit=1
                $region95: #{tpu_custom_call.1} parent=86 // loop_pre_header
                  _
                $region96: #{tpu_custom_call.1} parent=86 // loop_header
                  %s482 = sphi 0, %s486
                  %p483 = scmp.ge.s32.totalorder %s482, 1
                  %s487 = sphi %s390, %s390
                  %s488 = sphi %s386, %s386
                $region97: #{tpu_custom_call.1} parent=86 // loop_header_branch
                  %485 = sbr.rel (%p483) target = $region101
                $region98: #{tpu_custom_call.1} parent=86 // loop_body
                  %v489 = vld [vmem:[%s487] sm:$0xf]
                  %490 = vst [vmem:[%s488] sm:$0xf] %v489
                  %v491 = vld [vmem:[%s487 + $0x8] sm:$0xf]
                  %492 = vst [vmem:[%s488 + $0x4] sm:$0xf] %v491
                  %v493 = vld [vmem:[%s487 + $0x10] sm:$0xf]
                  %494 = vst [vmem:[%s488 + $0x8] sm:$0xf] %v493
                  %v495 = vld [vmem:[%s487 + $0x18] sm:$0xf]
                  %496 = vst [vmem:[%s488 + $0xc] sm:$0xf] %v495
                  %v497 = vld [vmem:[%s487 + $0x20] sm:$0xf]
                  %498 = vst [vmem:[%s488 + $0x10] sm:$0xf] %v497
                  %v499 = vld [vmem:[%s487 + $0x28] sm:$0xf]
                  %500 = vst [vmem:[%s488 + $0x14] sm:$0xf] %v499
                  %v501 = vld [vmem:[%s487 + $0x30] sm:$0xf]
                  %502 = vst [vmem:[%s488 + $0x18] sm:$0xf] %v501
                  %v503 = vld [vmem:[%s487 + $0x38] sm:$0xf]
                  %504 = vst [vmem:[%s488 + $0x1c] sm:$0xf] %v503
                  %v505 = vld [vmem:[%s487 + $0x40] sm:$0xf]
                  %506 = vst [vmem:[%s488 + $0x20] sm:$0xf] %v505
                  %v507 = vld [vmem:[%s487 + $0x48] sm:$0xf]
                  %508 = vst [vmem:[%s488 + $0x24] sm:$0xf] %v507
                  %v509 = vld [vmem:[%s487 + $0x50] sm:$0xf]
                  %510 = vst [vmem:[%s488 + $0x28] sm:$0xf] %v509
                  %v511 = vld [vmem:[%s487 + $0x58] sm:$0xf]
                  %512 = vst [vmem:[%s488 + $0x2c] sm:$0xf] %v511
                  %v513 = vld [vmem:[%s487 + $0x60] sm:$0xf]
                  %514 = vst [vmem:[%s488 + $0x30] sm:$0xf] %v513
                  %v515 = vld [vmem:[%s487 + $0x68] sm:$0xf]
                  %516 = vst [vmem:[%s488 + $0x34] sm:$0xf] %v515
                  %v517 = vld [vmem:[%s487 + $0x70] sm:$0xf]
                  %518 = vst [vmem:[%s488 + $0x38] sm:$0xf] %v517
                  %v519 = vld [vmem:[%s487 + $0x78] sm:$0xf]
                  %520 = vst [vmem:[%s488 + $0x3c] sm:$0xf] %v519
                  %v521 = vld [vmem:[%s487 + $0x80] sm:$0xf]
                  %522 = vst [vmem:[%s488 + $0x40] sm:$0xf] %v521
                  %v523 = vld [vmem:[%s487 + $0x88] sm:$0xf]
                  %524 = vst [vmem:[%s488 + $0x44] sm:$0xf] %v523
                  %v525 = vld [vmem:[%s487 + $0x90] sm:$0xf]
                  %526 = vst [vmem:[%s488 + $0x48] sm:$0xf] %v525
                  %v527 = vld [vmem:[%s487 + $0x98] sm:$0xf]
                  %528 = vst [vmem:[%s488 + $0x4c] sm:$0xf] %v527
                  %v529 = vld [vmem:[%s487 + $0xa0] sm:$0xf]
                  %530 = vst [vmem:[%s488 + $0x50] sm:$0xf] %v529
                  %v531 = vld [vmem:[%s487 + $0xa8] sm:$0xf]
                  %532 = vst [vmem:[%s488 + $0x54] sm:$0xf] %v531
                  %v533 = vld [vmem:[%s487 + $0xb0] sm:$0xf]
                  %534 = vst [vmem:[%s488 + $0x58] sm:$0xf] %v533
                  %v535 = vld [vmem:[%s487 + $0xb8] sm:$0xf]
                  %536 = vst [vmem:[%s488 + $0x5c] sm:$0xf] %v535
                  %v537 = vld [vmem:[%s487 + $0xc0] sm:$0xf]
                  %538 = vst [vmem:[%s488 + $0x60] sm:$0xf] %v537
                  %v539 = vld [vmem:[%s487 + $0xc8] sm:$0xf]
                  %540 = vst [vmem:[%s488 + $0x64] sm:$0xf] %v539
                  %v541 = vld [vmem:[%s487 + $0xd0] sm:$0xf]
                  %542 = vst [vmem:[%s488 + $0x68] sm:$0xf] %v541
                  %v543 = vld [vmem:[%s487 + $0xd8] sm:$0xf]
                  %544 = vst [vmem:[%s488 + $0x6c] sm:$0xf] %v543
                  %v545 = vld [vmem:[%s487 + $0xe0] sm:$0xf]
                  %546 = vst [vmem:[%s488 + $0x70] sm:$0xf] %v545
                  %v547 = vld [vmem:[%s487 + $0xe8] sm:$0xf]
                  %548 = vst [vmem:[%s488 + $0x74] sm:$0xf] %v547
                  %v549 = vld [vmem:[%s487 + $0xf0] sm:$0xf]
                  %550 = vst [vmem:[%s488 + $0x78] sm:$0xf] %v549
                  %v551 = vld [vmem:[%s487 + $0xf8] sm:$0xf]
                  %552 = vst [vmem:[%s488 + $0x7c] sm:$0xf] %v551
                $region99: #{tpu_custom_call.1} parent=86 // loop_footer
                  %s486 = sadd.s32 1, %s482
                $region100: #{tpu_custom_call.1} parent=86 // loop_footer_branch
                  %481 = sbr.rel target = $region96
                $region101: #{tpu_custom_call.1} parent=86 // loop_exit
                  _
              $region87: #{tpu_custom_call.1} parent=71 // pred_fallthru
                _
            $region72: #{tpu_custom_call.1} parent=67 // pred_fallthru
              _
            // Predicated region
            $region73: #{tpu_custom_call.1} parent=67 // pred_check
              _
            $region74: #{tpu_custom_call.1} parent=67 // pred_check_branch
              %396 = sbr.rel (0) target = $region76
            $region75: #{tpu_custom_call.1} parent=67 // pred_region
              loop: start=0, step=1, limit=1
              $region77: #{tpu_custom_call.1} parent=75 // loop_pre_header
                _
              $region78: #{tpu_custom_call.1} parent=75 // loop_header
                %s399 = sphi 0, %s403
                %p400 = scmp.ge.s32.totalorder %s399, 1
                %s404 = sphi %s390, %s390
                %s405 = sphi %s386, %s386
              $region79: #{tpu_custom_call.1} parent=75 // loop_header_branch
                %402 = sbr.rel (%p400) target = $region83
              $region80: #{tpu_custom_call.1} parent=75 // loop_body
                %v406 = vld [vmem:[%s404] sm:$0xf]
                %407 = vst [vmem:[%s405] sm:$0xf] %v406
                %v408 = vld [vmem:[%s404 + $0x8] sm:$0xf]
                %409 = vst [vmem:[%s405 + $0x4] sm:$0xf] %v408
                %v410 = vld [vmem:[%s404 + $0x10] sm:$0xf]
                %411 = vst [vmem:[%s405 + $0x8] sm:$0xf] %v410
                %v412 = vld [vmem:[%s404 + $0x18] sm:$0xf]
                %413 = vst [vmem:[%s405 + $0xc] sm:$0xf] %v412
                %v414 = vld [vmem:[%s404 + $0x20] sm:$0xf]
                %415 = vst [vmem:[%s405 + $0x10] sm:$0xf] %v414
                %v416 = vld [vmem:[%s404 + $0x28] sm:$0xf]
                %417 = vst [vmem:[%s405 + $0x14] sm:$0xf] %v416
                %v418 = vld [vmem:[%s404 + $0x30] sm:$0xf]
                %419 = vst [vmem:[%s405 + $0x18] sm:$0xf] %v418
                %v420 = vld [vmem:[%s404 + $0x38] sm:$0xf]
                %421 = vst [vmem:[%s405 + $0x1c] sm:$0xf] %v420
                %v422 = vld [vmem:[%s404 + $0x40] sm:$0xf]
                %423 = vst [vmem:[%s405 + $0x20] sm:$0xf] %v422
                %v424 = vld [vmem:[%s404 + $0x48] sm:$0xf]
                %425 = vst [vmem:[%s405 + $0x24] sm:$0xf] %v424
                %v426 = vld [vmem:[%s404 + $0x50] sm:$0xf]
                %427 = vst [vmem:[%s405 + $0x28] sm:$0xf] %v426
                %v428 = vld [vmem:[%s404 + $0x58] sm:$0xf]
                %429 = vst [vmem:[%s405 + $0x2c] sm:$0xf] %v428
                %v430 = vld [vmem:[%s404 + $0x60] sm:$0xf]
                %431 = vst [vmem:[%s405 + $0x30] sm:$0xf] %v430
                %v432 = vld [vmem:[%s404 + $0x68] sm:$0xf]
                %433 = vst [vmem:[%s405 + $0x34] sm:$0xf] %v432
                %v434 = vld [vmem:[%s404 + $0x70] sm:$0xf]
                %435 = vst [vmem:[%s405 + $0x38] sm:$0xf] %v434
                %v436 = vld [vmem:[%s404 + $0x78] sm:$0xf]
                %437 = vst [vmem:[%s405 + $0x3c] sm:$0xf] %v436
                %v438 = vld [vmem:[%s404 + $0x80] sm:$0xf]
                %439 = vst [vmem:[%s405 + $0x40] sm:$0xf] %v438
                %v440 = vld [vmem:[%s404 + $0x88] sm:$0xf]
                %441 = vst [vmem:[%s405 + $0x44] sm:$0xf] %v440
                %v442 = vld [vmem:[%s404 + $0x90] sm:$0xf]
                %443 = vst [vmem:[%s405 + $0x48] sm:$0xf] %v442
                %v444 = vld [vmem:[%s404 + $0x98] sm:$0xf]
                %445 = vst [vmem:[%s405 + $0x4c] sm:$0xf] %v444
                %v446 = vld [vmem:[%s404 + $0xa0] sm:$0xf]
                %447 = vst [vmem:[%s405 + $0x50] sm:$0xf] %v446
                %v448 = vld [vmem:[%s404 + $0xa8] sm:$0xf]
                %449 = vst [vmem:[%s405 + $0x54] sm:$0xf] %v448
                %v450 = vld [vmem:[%s404 + $0xb0] sm:$0xf]
                %451 = vst [vmem:[%s405 + $0x58] sm:$0xf] %v450
                %v452 = vld [vmem:[%s404 + $0xb8] sm:$0xf]
                %453 = vst [vmem:[%s405 + $0x5c] sm:$0xf] %v452
                %v454 = vld [vmem:[%s404 + $0xc0] sm:$0xf]
                %455 = vst [vmem:[%s405 + $0x60] sm:$0xf] %v454
                %v456 = vld [vmem:[%s404 + $0xc8] sm:$0xf]
                %457 = vst [vmem:[%s405 + $0x64] sm:$0xf] %v456
                %v458 = vld [vmem:[%s404 + $0xd0] sm:$0xf]
                %459 = vst [vmem:[%s405 + $0x68] sm:$0xf] %v458
                %v460 = vld [vmem:[%s404 + $0xd8] sm:$0xf]
                %461 = vst [vmem:[%s405 + $0x6c] sm:$0xf] %v460
                %v462 = vld [vmem:[%s404 + $0xe0] sm:$0xf]
                %463 = vst [vmem:[%s405 + $0x70] sm:$0xf] %v462
                %v464 = vld [vmem:[%s404 + $0xe8] sm:$0xf]
                %465 = vst [vmem:[%s405 + $0x74] sm:$0xf] %v464
                %v466 = vld [vmem:[%s404 + $0xf0] sm:$0xf]
                %467 = vst [vmem:[%s405 + $0x78] sm:$0xf] %v466
                %v468 = vld [vmem:[%s404 + $0xf8] sm:$0xf]
                %469 = vst [vmem:[%s405 + $0x7c] sm:$0xf] %v468
              $region81: #{tpu_custom_call.1} parent=75 // loop_footer
                %s403 = sadd.s32 1, %s399
              $region82: #{tpu_custom_call.1} parent=75 // loop_footer_branch
                %398 = sbr.rel target = $region78
              $region83: #{tpu_custom_call.1} parent=75 // loop_exit
                _
            $region76: #{tpu_custom_call.1} parent=67 // pred_fallthru
              _
          $region68: #{tpu_custom_call.1} parent=63 // pred_fallthru
            _
          %553 = vnop
        $region64: #{tpu_custom_call.1} parent=59 // pred_fallthru
          _
      $region60: #{tpu_custom_call.1} parent=5 // pred_fallthru
        _
      %p554 = scmp.le.s32.totalorder 1, %s19
      %p555 = scmp.lt.s32.totalorder %s19, 5
      %p556 = pnand %p554, %p555
      %p557 = pneg %p556
      // Predicated region
      $region102: #{tpu_custom_call.1} parent=5 // pred_check
        _
      $region103: #{tpu_custom_call.1} parent=5 // pred_check_branch
        %559 = sbr.rel (%p556) target = $region105
      $region104: #{tpu_custom_call.1} parent=5 // pred_region
        %s560 = ssub.s32 %s19, 1
        %s561 = sand.u32 %s46, 1
        %s562 = sand.u32 %s46, 1
        %s563 = smul.addr %s562, 128
        %s564 = scalar_lea.vmem [#allocation2], %s563
        // Predicated region
        $region106: #{tpu_custom_call.1} parent=104 // pred_check
          %p565 = pneg %p59
        $region107: #{tpu_custom_call.1} parent=104 // pred_check_branch
          %567 = sbr.rel (%p565) target = $region109
        $region108: #{tpu_custom_call.1} parent=104 // pred_region
          _
        $region109: #{tpu_custom_call.1} parent=104 // pred_fallthru
          _
        // Predicated region
        $region110: #{tpu_custom_call.1} parent=104 // pred_check
          %p568 = pneg %p206
        $region111: #{tpu_custom_call.1} parent=104 // pred_check_branch
          %570 = sbr.rel (%p568) target = $region113
        $region112: #{tpu_custom_call.1} parent=104 // pred_region
          %571 = dma.done [#allocation4], 512
        $region113: #{tpu_custom_call.1} parent=104 // pred_fallthru
          _
        %s572 = sand.u32 %s46, 1
        %s573 = sand.u32 %s46, 1
        %s574 = smul.addr %s573, 128
        %s575 = scalar_lea.vmem [#allocation2], %s574
        %p576 = pneg %p59
        %p577 = pneg %p56
        %p578 = pneg %p80
        %p579 = pneg %p77
        %p580 = pneg %p101
        %p581 = pneg %p98
        %p582 = pneg %p122
        %p583 = pneg %p119
        %p584 = pneg %p143
        %p585 = pneg %p140
        %p586 = pneg %p164
        %p587 = pneg %p161
        %p588 = pneg %p185
        %p589 = pneg %p182
        %p590 = pneg %p206
        %p591 = pneg %p203
        %p592 = pneg %p227
        %p593 = pneg %p224
        %p594 = pneg %p248
        %p595 = pneg %p245
        %p596 = pneg %p269
        %p597 = pneg %p266
        %p598 = pneg %p290
        %p599 = pneg %p287
        %p600 = pneg %p318
        %p601 = pneg %p315
        %p602 = scmp.lt.s32.totalorder %s28, 1
        %s603 = scalar_select %p602, %s28, 1
        %p604 = scmp.lt.s32.totalorder %s29, 1
        %s605 = scalar_select %p604, %s29, 1
        %s606 = smul.addr %s603, 2
        %s607 = sadd.s32 %s605, %s606
        %s608 = smul.addr %s607, 4
        %s609 = scalar_lea.vmem %s12, %s608
        %p610 = scmp.lt.s32.totalorder %s28, 1
        %s611 = scalar_select %p610, %s28, 1
        %p612 = scmp.lt.s32.totalorder %s29, 1
        %s613 = scalar_select %p612, %s29, 1
        %s614 = smul.addr %s611, 2
        %s615 = sadd.s32 %s613, %s614
        %s616 = smul.addr %s615, 4
        %s617 = scalar_lea.vmem %s12, %s616
        %v619 = vld [vmem:[%s564] sm:$0xf]
        %v620 = vld [vmem:[%s564 + $0x4] sm:$0xf]
        %v621 = vld [vmem:[%s564 + $0x8] sm:$0xf]
        %v622 = vld [vmem:[%s564 + $0xc] sm:$0xf]
        %v623 = vld [vmem:[%s564 + $0x10] sm:$0xf]
        %v624 = vld [vmem:[%s564 + $0x14] sm:$0xf]
        %v625 = vld [vmem:[%s564 + $0x18] sm:$0xf]
        %v626 = vld [vmem:[%s564 + $0x1c] sm:$0xf]
        %v627 = vld [vmem:[%s564 + $0x20] sm:$0xf]
        %v628 = vld [vmem:[%s564 + $0x24] sm:$0xf]
        %v629 = vld [vmem:[%s564 + $0x28] sm:$0xf]
        %v630 = vld [vmem:[%s564 + $0x2c] sm:$0xf]
        %v631 = vld [vmem:[%s564 + $0x30] sm:$0xf]
        %v632 = vld [vmem:[%s564 + $0x34] sm:$0xf]
        %v633 = vld [vmem:[%s564 + $0x38] sm:$0xf]
        %v634 = vld [vmem:[%s564 + $0x3c] sm:$0xf]
        %v635 = vld [vmem:[%s564 + $0x40] sm:$0xf]
        %v636 = vld [vmem:[%s564 + $0x44] sm:$0xf]
        %v637 = vld [vmem:[%s564 + $0x48] sm:$0xf]
        %v638 = vld [vmem:[%s564 + $0x4c] sm:$0xf]
        %v639 = vld [vmem:[%s564 + $0x50] sm:$0xf]
        %v640 = vld [vmem:[%s564 + $0x54] sm:$0xf]
        %v641 = vld [vmem:[%s564 + $0x58] sm:$0xf]
        %v642 = vld [vmem:[%s564 + $0x5c] sm:$0xf]
        %v643 = vld [vmem:[%s564 + $0x60] sm:$0xf]
        %v644 = vld [vmem:[%s564 + $0x64] sm:$0xf]
        %v645 = vld [vmem:[%s564 + $0x68] sm:$0xf]
        %v646 = vld [vmem:[%s564 + $0x6c] sm:$0xf]
        %v647 = vld [vmem:[%s564 + $0x70] sm:$0xf]
        %v648 = vld [vmem:[%s564 + $0x74] sm:$0xf]
        %v649 = vld [vmem:[%s564 + $0x78] sm:$0xf]
        %v650 = vld [vmem:[%s564 + $0x7c] sm:$0xf]
        %v651 = vld [vmem:[%s1] sm:$0xff]
        %v652 = vld [vmem:[%s1 + $0x8] sm:$0xff]
        %v653 = vld [vmem:[%s1 + $0x10] sm:$0xff]
        %v654 = vld [vmem:[%s1 + $0x18] sm:$0xff]
        %v655 = vld [vmem:[%s1 + $0x20] sm:$0xff]
        %v656 = vld [vmem:[%s1 + $0x28] sm:$0xff]
        %v657 = vld [vmem:[%s1 + $0x30] sm:$0xff]
        %v658 = vld [vmem:[%s1 + $0x38] sm:$0xff]
        %v659 = vld [vmem:[%s1 + $0x40] sm:$0xff]
        %v660 = vld [vmem:[%s1 + $0x48] sm:$0xff]
        %v661 = vld [vmem:[%s1 + $0x50] sm:$0xff]
        %v662 = vld [vmem:[%s1 + $0x58] sm:$0xff]
        %v663 = vld [vmem:[%s1 + $0x60] sm:$0xff]
        %v664 = vld [vmem:[%s1 + $0x68] sm:$0xff]
        %v665 = vld [vmem:[%s1 + $0x70] sm:$0xff]
        %v666 = vld [vmem:[%s1 + $0x78] sm:$0xff]
        %v667 = vld [vmem:[%s1 + $0x80] sm:$0xff]
        %v668 = vld [vmem:[%s1 + $0x88] sm:$0xff]
        %v669 = vld [vmem:[%s1 + $0x90] sm:$0xff]
        %v670 = vld [vmem:[%s1 + $0x98] sm:$0xff]
        %v671 = vld [vmem:[%s1 + $0xa0] sm:$0xff]
        %v672 = vld [vmem:[%s1 + $0xa8] sm:$0xff]
        %v673 = vld [vmem:[%s1 + $0xb0] sm:$0xff]
        %v674 = vld [vmem:[%s1 + $0xb8] sm:$0xff]
        %v675 = vld [vmem:[%s1 + $0xc0] sm:$0xff]
        %v676 = vld [vmem:[%s1 + $0xc8] sm:$0xff]
        %v677 = vld [vmem:[%s1 + $0xd0] sm:$0xff]
        %v678 = vld [vmem:[%s1 + $0xd8] sm:$0xff]
        %v679 = vld [vmem:[%s1 + $0xe0] sm:$0xff]
        %v680 = vld [vmem:[%s1 + $0xe8] sm:$0xff]
        %v681 = vld [vmem:[%s1 + $0xf0] sm:$0xff]
        %v682 = vld [vmem:[%s1 + $0xf8] sm:$0xff]
        %v715 = vunpack.c.l.b16 %v651
        %v716 = vunpack.c.h.b16 %v651
        %v717 = vunpack.c.l.b16 %v652
        %v718 = vunpack.c.h.b16 %v652
        %v719 = vunpack.c.l.b16 %v653
        %v720 = vunpack.c.h.b16 %v653
        %v721 = vunpack.c.l.b16 %v654
        %v722 = vunpack.c.h.b16 %v654
        %v723 = vunpack.c.l.b16 %v655
        %v724 = vunpack.c.h.b16 %v655
        %v725 = vunpack.c.l.b16 %v656
        %v726 = vunpack.c.h.b16 %v656
        %v727 = vunpack.c.l.b16 %v657
        %v728 = vunpack.c.h.b16 %v657
        %v729 = vunpack.c.l.b16 %v658
        %v730 = vunpack.c.h.b16 %v658
        %v731 = vunpack.c.l.b16 %v659
        %v732 = vunpack.c.h.b16 %v659
        %v733 = vunpack.c.l.b16 %v660
        %v734 = vunpack.c.h.b16 %v660
        %v735 = vunpack.c.l.b16 %v661
        %v736 = vunpack.c.h.b16 %v661
        %v737 = vunpack.c.l.b16 %v662
        %v738 = vunpack.c.h.b16 %v662
        %v739 = vunpack.c.l.b16 %v663
        %v740 = vunpack.c.h.b16 %v663
        %v741 = vunpack.c.l.b16 %v664
        %v742 = vunpack.c.h.b16 %v664
        %v743 = vunpack.c.l.b16 %v665
        %v744 = vunpack.c.h.b16 %v665
        %v745 = vunpack.c.l.b16 %v666
        %v746 = vunpack.c.h.b16 %v666
        %v747 = vunpack.c.l.b16 %v667
        %v748 = vunpack.c.h.b16 %v667
        %v749 = vunpack.c.l.b16 %v668
        %v750 = vunpack.c.h.b16 %v668
        %v751 = vunpack.c.l.b16 %v669
        %v752 = vunpack.c.h.b16 %v669
        %v753 = vunpack.c.l.b16 %v670
        %v754 = vunpack.c.h.b16 %v670
        %v755 = vunpack.c.l.b16 %v671
        %v756 = vunpack.c.h.b16 %v671
        %v757 = vunpack.c.l.b16 %v672
        %v758 = vunpack.c.h.b16 %v672
        %v759 = vunpack.c.l.b16 %v673
        %v760 = vunpack.c.h.b16 %v673
        %v761 = vunpack.c.l.b16 %v674
        %v762 = vunpack.c.h.b16 %v674
        %v763 = vunpack.c.l.b16 %v675
        %v764 = vunpack.c.h.b16 %v675
        %v765 = vunpack.c.l.b16 %v676
        %v766 = vunpack.c.h.b16 %v676
        %v767 = vunpack.c.l.b16 %v677
        %v768 = vunpack.c.h.b16 %v677
        %v769 = vunpack.c.l.b16 %v678
        %v770 = vunpack.c.h.b16 %v678
        %v771 = vunpack.c.l.b16 %v679
        %v772 = vunpack.c.h.b16 %v679
        %v773 = vunpack.c.l.b16 %v680
        %v774 = vunpack.c.h.b16 %v680
        %v775 = vunpack.c.l.b16 %v681
        %v776 = vunpack.c.h.b16 %v681
        %v777 = vunpack.c.l.b16 %v682
        %v778 = vunpack.c.h.b16 %v682
        %v779 = vpack.c.b16 %v717, %v715
        %v780 = vpack.c.b16 %v718, %v716
        %v781 = vpack.c.b16 %v721, %v719
        %v782 = vpack.c.b16 %v722, %v720
        %v783 = vpack.c.b16 %v725, %v723
        %v784 = vpack.c.b16 %v726, %v724
        %v785 = vpack.c.b16 %v729, %v727
        %v786 = vpack.c.b16 %v730, %v728
        %v787 = vpack.c.b16 %v733, %v731
        %v788 = vpack.c.b16 %v734, %v732
        %v789 = vpack.c.b16 %v737, %v735
        %v790 = vpack.c.b16 %v738, %v736
        %v791 = vpack.c.b16 %v741, %v739
        %v792 = vpack.c.b16 %v742, %v740
        %v793 = vpack.c.b16 %v745, %v743
        %v794 = vpack.c.b16 %v746, %v744
        %v795 = vpack.c.b16 %v749, %v747
        %v796 = vpack.c.b16 %v750, %v748
        %v797 = vpack.c.b16 %v753, %v751
        %v798 = vpack.c.b16 %v754, %v752
        %v799 = vpack.c.b16 %v757, %v755
        %v800 = vpack.c.b16 %v758, %v756
        %v801 = vpack.c.b16 %v761, %v759
        %v802 = vpack.c.b16 %v762, %v760
        %v803 = vpack.c.b16 %v765, %v763
        %v804 = vpack.c.b16 %v766, %v764
        %v805 = vpack.c.b16 %v769, %v767
        %v806 = vpack.c.b16 %v770, %v768
        %v807 = vpack.c.b16 %v773, %v771
        %v808 = vpack.c.b16 %v774, %v772
        %v809 = vpack.c.b16 %v777, %v775
        %v810 = vpack.c.b16 %v778, %v776
        %v875 = vunpack.c.l.b16 %v619
        %v876 = vunpack.c.l.b16 %v620
        %v877 = vunpack.c.l.b16 %v621
        %v878 = vunpack.c.l.b16 %v622
        %v879 = vunpack.c.l.b16 %v623
        %v880 = vunpack.c.l.b16 %v624
        %v881 = vunpack.c.l.b16 %v625
        %v882 = vunpack.c.l.b16 %v626
        %v883 = vunpack.c.l.b16 %v627
        %v884 = vunpack.c.l.b16 %v628
        %v885 = vunpack.c.l.b16 %v629
        %v886 = vunpack.c.l.b16 %v630
        %v887 = vunpack.c.l.b16 %v631
        %v888 = vunpack.c.l.b16 %v632
        %v889 = vunpack.c.l.b16 %v633
        %v890 = vunpack.c.l.b16 %v634
        %v891 = vunpack.c.l.b16 %v635
        %v892 = vunpack.c.l.b16 %v636
        %v893 = vunpack.c.l.b16 %v637
        %v894 = vunpack.c.l.b16 %v638
        %v895 = vunpack.c.l.b16 %v639
        %v896 = vunpack.c.l.b16 %v640
        %v897 = vunpack.c.l.b16 %v641
        %v898 = vunpack.c.l.b16 %v642
        %v899 = vunpack.c.l.b16 %v643
        %v900 = vunpack.c.l.b16 %v644
        %v901 = vunpack.c.l.b16 %v645
        %v902 = vunpack.c.l.b16 %v646
        %v903 = vunpack.c.l.b16 %v647
        %v904 = vunpack.c.l.b16 %v648
        %v905 = vunpack.c.l.b16 %v649
        %v906 = vunpack.c.l.b16 %v650
        %v907 = vpack.c.b16 %v876, %v875
        %v908 = vpack.c.b16 %v878, %v877
        %v909 = vpack.c.b16 %v880, %v879
        %v910 = vpack.c.b16 %v882, %v881
        %v911 = vpack.c.b16 %v884, %v883
        %v912 = vpack.c.b16 %v886, %v885
        %v913 = vpack.c.b16 %v888, %v887
        %v914 = vpack.c.b16 %v890, %v889
        %v915 = vpack.c.b16 %v892, %v891
        %v916 = vpack.c.b16 %v894, %v893
        %v917 = vpack.c.b16 %v896, %v895
        %v918 = vpack.c.b16 %v898, %v897
        %v919 = vpack.c.b16 %v900, %v899
        %v920 = vpack.c.b16 %v902, %v901
        %v921 = vpack.c.b16 %v904, %v903
        %v922 = vpack.c.b16 %v906, %v905
        %939 = vmatprep.subr.bf16.mxu0 0
        %940 = vmatpush1.bf16.msra.mxu0 %v907
        %941 = vmatprep.subr.bf16.mxu0 0
        %942 = vmatpush1.bf16.msra.mxu0 %v908
        %943 = vmatprep.subr.bf16.mxu0 0
        %944 = vmatpush1.bf16.msra.mxu0 %v909
        %945 = vmatprep.subr.bf16.mxu0 0
        %946 = vmatpush1.bf16.msra.mxu0 %v910
        %947 = vmatprep.subr.bf16.mxu0 0
        %948 = vmatpush1.bf16.msra.mxu0 %v911
        %949 = vmatprep.subr.bf16.mxu0 0
        %950 = vmatpush1.bf16.msra.mxu0 %v912
        %951 = vmatprep.subr.bf16.mxu0 0
        %952 = vmatpush1.bf16.msra.mxu0 %v913
        %953 = vmatprep.subr.bf16.mxu0 0
        %954 = vmatpush1.bf16.msra.mxu0 %v914
        %955 = vmatprep.subr.bf16.mxu0 0
        %956 = vmatpush1.bf16.msra.mxu0 %v915
        %957 = vmatprep.subr.bf16.mxu0 0
        %958 = vmatpush1.bf16.msra.mxu0 %v916
        %959 = vmatprep.subr.bf16.mxu0 0
        %960 = vmatpush1.bf16.msra.mxu0 %v917
        %961 = vmatprep.subr.bf16.mxu0 0
        %962 = vmatpush1.bf16.msra.mxu0 %v918
        %963 = vmatprep.subr.bf16.mxu0 0
        %964 = vmatpush1.bf16.msra.mxu0 %v919
        %965 = vmatprep.subr.bf16.mxu0 0
        %966 = vmatpush1.bf16.msra.mxu0 %v920
        %967 = vmatprep.subr.bf16.mxu0 0
        %968 = vmatpush1.bf16.msra.mxu0 %v921
        %969 = vmatprep.subr.bf16.mxu0 0
        %970 = vmatpush1.bf16.msra.mxu0 %v922
        %971 = vmatprep.mubr.bf16.mxu0 %v780
        %972 = vmatmul.mubr.bf16.gmra.mrb[0].mxu0 %v779
        %v973 = vpop.f32.mrb[0].mxu0
        %v974 = vadd.f32 0.0, %v973
        %v975 = vpop.f32.mrb[0].mxu0
        %v976 = vpop.f32.mrb[0].mxu0
        %v977 = vadd.f32 0.0, %v976
        %v978 = vpop.f32.mrb[0].mxu0
        %979 = vmatprep.mubr.bf16.mxu0 %v782
        %980 = vmatmul.mubr.bf16.gmra.mrb[0].mxu0 %v781
        %v981 = vpop.f32.mrb[0].mxu0
        %v982 = vadd.f32 0.0, %v981
        %v983 = vpop.f32.mrb[0].mxu0
        %v984 = vpop.f32.mrb[0].mxu0
        %v985 = vadd.f32 0.0, %v984
        %v986 = vpop.f32.mrb[0].mxu0
        %987 = vmatprep.mubr.bf16.mxu0 %v784
        %988 = vmatmul.mubr.bf16.gmra.mrb[0].mxu0 %v783
        %v989 = vpop.f32.mrb[0].mxu0
        %v990 = vadd.f32 0.0, %v989
        %v991 = vpop.f32.mrb[0].mxu0
        %v992 = vpop.f32.mrb[0].mxu0
        %v993 = vadd.f32 0.0, %v992
        %v994 = vpop.f32.mrb[0].mxu0
        %995 = vmatprep.mubr.bf16.mxu0 %v786
        %996 = vmatmul.mubr.bf16.gmra.mrb[0].mxu0 %v785
        %v997 = vpop.f32.mrb[0].mxu0
        %v998 = vadd.f32 0.0, %v997
        %v999 = vpop.f32.mrb[0].mxu0
        %v1000 = vpop.f32.mrb[0].mxu0
        %v1001 = vadd.f32 0.0, %v1000
        %v1002 = vpop.f32.mrb[0].mxu0
        %1003 = vmatprep.mubr.bf16.mxu0 %v788
        %1004 = vmatmul.mubr.bf16.gmra.mrb[0].mxu0 %v787
        %v1005 = vpop.f32.mrb[0].mxu0
        %v1006 = vadd.f32 0.0, %v1005
        %v1007 = vpop.f32.mrb[0].mxu0
        %v1008 = vpop.f32.mrb[0].mxu0
        %v1009 = vadd.f32 0.0, %v1008
        %v1010 = vpop.f32.mrb[0].mxu0
        %1011 = vmatprep.mubr.bf16.mxu0 %v790
        %1012 = vmatmul.mubr.bf16.gmra.mrb[0].mxu0 %v789
        %v1013 = vpop.f32.mrb[0].mxu0
        %v1014 = vadd.f32 0.0, %v1013
        %v1015 = vpop.f32.mrb[0].mxu0
        %v1016 = vpop.f32.mrb[0].mxu0
        %v1017 = vadd.f32 0.0, %v1016
        %v1018 = vpop.f32.mrb[0].mxu0
        %1019 = vmatprep.mubr.bf16.mxu0 %v792
        %1020 = vmatmul.mubr.bf16.gmra.mrb[0].mxu0 %v791
        %v1021 = vpop.f32.mrb[0].mxu0
        %v1022 = vadd.f32 0.0, %v1021
        %v1023 = vpop.f32.mrb[0].mxu0
        %v1024 = vpop.f32.mrb[0].mxu0
        %v1025 = vadd.f32 0.0, %v1024
        %v1026 = vpop.f32.mrb[0].mxu0
        %1027 = vmatprep.mubr.bf16.mxu0 %v794
        %1028 = vmatmul.mubr.bf16.gmra.mrb[0].mxu0 %v793
        %v1029 = vpop.f32.mrb[0].mxu0
        %v1030 = vadd.f32 0.0, %v1029
        %v1031 = vpop.f32.mrb[0].mxu0
        %v1032 = vpop.f32.mrb[0].mxu0
        %v1033 = vadd.f32 0.0, %v1032
        %v1034 = vpop.f32.mrb[0].mxu0
        %1035 = vmatprep.mubr.bf16.mxu0 %v796
        %1036 = vmatmul.mubr.bf16.gmra.mrb[0].mxu0 %v795
        %v1037 = vpop.f32.mrb[0].mxu0
        %v1038 = vadd.f32 0.0, %v1037
        %v1039 = vpop.f32.mrb[0].mxu0
        %v1040 = vpop.f32.mrb[0].mxu0
        %v1041 = vadd.f32 0.0, %v1040
        %v1042 = vpop.f32.mrb[0].mxu0
        %1043 = vmatprep.mubr.bf16.mxu0 %v798
        %1044 = vmatmul.mubr.bf16.gmra.mrb[0].mxu0 %v797
        %v1045 = vpop.f32.mrb[0].mxu0
        %v1046 = vadd.f32 0.0, %v1045
        %v1047 = vpop.f32.mrb[0].mxu0
        %v1048 = vpop.f32.mrb[0].mxu0
        %v1049 = vadd.f32 0.0, %v1048
        %v1050 = vpop.f32.mrb[0].mxu0
        %1051 = vmatprep.mubr.bf16.mxu0 %v800
        %1052 = vmatmul.mubr.bf16.gmra.mrb[0].mxu0 %v799
        %v1053 = vpop.f32.mrb[0].mxu0
        %v1054 = vadd.f32 0.0, %v1053
        %v1055 = vpop.f32.mrb[0].mxu0
        %v1056 = vpop.f32.mrb[0].mxu0
        %v1057 = vadd.f32 0.0, %v1056
        %v1058 = vpop.f32.mrb[0].mxu0
        %1059 = vmatprep.mubr.bf16.mxu0 %v802
        %1060 = vmatmul.mubr.bf16.gmra.mrb[0].mxu0 %v801
        %v1061 = vpop.f32.mrb[0].mxu0
        %v1062 = vadd.f32 0.0, %v1061
        %v1063 = vpop.f32.mrb[0].mxu0
        %v1064 = vpop.f32.mrb[0].mxu0
        %v1065 = vadd.f32 0.0, %v1064
        %v1066 = vpop.f32.mrb[0].mxu0
        %1067 = vmatprep.mubr.bf16.mxu0 %v804
        %1068 = vmatmul.mubr.bf16.gmra.mrb[0].mxu0 %v803
        %v1069 = vpop.f32.mrb[0].mxu0
        %v1070 = vadd.f32 0.0, %v1069
        %v1071 = vpop.f32.mrb[0].mxu0
        %v1072 = vpop.f32.mrb[0].mxu0
        %v1073 = vadd.f32 0.0, %v1072
        %v1074 = vpop.f32.mrb[0].mxu0
        %1075 = vmatprep.mubr.bf16.mxu0 %v806
        %1076 = vmatmul.mubr.bf16.gmra.mrb[0].mxu0 %v805
        %v1077 = vpop.f32.mrb[0].mxu0
        %v1078 = vadd.f32 0.0, %v1077
        %v1079 = vpop.f32.mrb[0].mxu0
        %v1080 = vpop.f32.mrb[0].mxu0
        %v1081 = vadd.f32 0.0, %v1080
        %v1082 = vpop.f32.mrb[0].mxu0
        %1083 = vmatprep.mubr.bf16.mxu0 %v808
        %1084 = vmatmul.mubr.bf16.gmra.mrb[0].mxu0 %v807
        %v1085 = vpop.f32.mrb[0].mxu0
        %v1086 = vadd.f32 0.0, %v1085
        %v1087 = vpop.f32.mrb[0].mxu0
        %v1088 = vpop.f32.mrb[0].mxu0
        %v1089 = vadd.f32 0.0, %v1088
        %v1090 = vpop.f32.mrb[0].mxu0
        %1091 = vmatprep.mubr.bf16.mxu0 %v810
        %1092 = vmatmul.mubr.bf16.gmra.mrb[0].mxu0 %v809
        %v1093 = vpop.f32.mrb[0].mxu0
        %v1094 = vadd.f32 0.0, %v1093
        %v1095 = vpop.f32.mrb[0].mxu0
        %v1096 = vpop.f32.mrb[0].mxu0
        %v1097 = vadd.f32 0.0, %v1096
        %v1098 = vpop.f32.mrb[0].mxu0
        %1099 = vdwg.mxu0
        %v1100 = vld [vmem:[%s2] sm:$0xff]
        %v1101 = vld [vmem:[%s2 + $0x8] sm:$0xff]
        %v1102 = vld [vmem:[%s2 + $0x10] sm:$0xff]
        %v1103 = vld [vmem:[%s2 + $0x18] sm:$0xff]
        %v1104 = vld [vmem:[%s2 + $0x20] sm:$0xff]
        %v1105 = vld [vmem:[%s2 + $0x28] sm:$0xff]
        %v1106 = vld [vmem:[%s2 + $0x30] sm:$0xff]
        %v1107 = vld [vmem:[%s2 + $0x38] sm:$0xff]
        %v1108 = vld [vmem:[%s2 + $0x40] sm:$0xff]
        %v1109 = vld [vmem:[%s2 + $0x48] sm:$0xff]
        %v1110 = vld [vmem:[%s2 + $0x50] sm:$0xff]
        %v1111 = vld [vmem:[%s2 + $0x58] sm:$0xff]
        %v1112 = vld [vmem:[%s2 + $0x60] sm:$0xff]
        %v1113 = vld [vmem:[%s2 + $0x68] sm:$0xff]
        %v1114 = vld [vmem:[%s2 + $0x70] sm:$0xff]
        %v1115 = vld [vmem:[%s2 + $0x78] sm:$0xff]
        %v1116 = vld [vmem:[%s2 + $0x80] sm:$0xff]
        %v1117 = vld [vmem:[%s2 + $0x88] sm:$0xff]
        %v1118 = vld [vmem:[%s2 + $0x90] sm:$0xff]
        %v1119 = vld [vmem:[%s2 + $0x98] sm:$0xff]
        %v1120 = vld [vmem:[%s2 + $0xa0] sm:$0xff]
        %v1121 = vld [vmem:[%s2 + $0xa8] sm:$0xff]
        %v1122 = vld [vmem:[%s2 + $0xb0] sm:$0xff]
        %v1123 = vld [vmem:[%s2 + $0xb8] sm:$0xff]
        %v1124 = vld [vmem:[%s2 + $0xc0] sm:$0xff]
        %v1125 = vld [vmem:[%s2 + $0xc8] sm:$0xff]
        %v1126 = vld [vmem:[%s2 + $0xd0] sm:$0xff]
        %v1127 = vld [vmem:[%s2 + $0xd8] sm:$0xff]
        %v1128 = vld [vmem:[%s2 + $0xe0] sm:$0xff]
        %v1129 = vld [vmem:[%s2 + $0xe8] sm:$0xff]
        %v1130 = vld [vmem:[%s2 + $0xf0] sm:$0xff]
        %v1131 = vld [vmem:[%s2 + $0xf8] sm:$0xff]
        %1133 = vset.pattern.permute.xlu0 0
        %1134 = vperm.xlu0 %1133, %v1100
        %v1135 = vpop.permute.xlu0 %1134
        %1138 = vset.pattern.permute.xlu0 0
        %1139 = vperm.xlu0 %1138, %v1101
        %v1140 = vpop.permute.xlu0 %1139
        %1143 = vset.pattern.permute.xlu0 0
        %1144 = vperm.xlu0 %1143, %v1102
        %v1145 = vpop.permute.xlu0 %1144
        %1148 = vset.pattern.permute.xlu0 0
        %1149 = vperm.xlu0 %1148, %v1103
        %v1150 = vpop.permute.xlu0 %1149
        %1153 = vset.pattern.permute.xlu0 0
        %1154 = vperm.xlu0 %1153, %v1104
        %v1155 = vpop.permute.xlu0 %1154
        %1158 = vset.pattern.permute.xlu0 0
        %1159 = vperm.xlu0 %1158, %v1105
        %v1160 = vpop.permute.xlu0 %1159
        %1163 = vset.pattern.permute.xlu0 0
        %1164 = vperm.xlu0 %1163, %v1106
        %v1165 = vpop.permute.xlu0 %1164
        %1168 = vset.pattern.permute.xlu0 0
        %1169 = vperm.xlu0 %1168, %v1107
        %v1170 = vpop.permute.xlu0 %1169
        %1173 = vset.pattern.permute.xlu0 0
        %1174 = vperm.xlu0 %1173, %v1108
        %v1175 = vpop.permute.xlu0 %1174
        %1178 = vset.pattern.permute.xlu0 0
        %1179 = vperm.xlu0 %1178, %v1109
        %v1180 = vpop.permute.xlu0 %1179
        %1183 = vset.pattern.permute.xlu0 0
        %1184 = vperm.xlu0 %1183, %v1110
        %v1185 = vpop.permute.xlu0 %1184
        %1188 = vset.pattern.permute.xlu0 0
        %1189 = vperm.xlu0 %1188, %v1111
        %v1190 = vpop.permute.xlu0 %1189
        %1193 = vset.pattern.permute.xlu0 0
        %1194 = vperm.xlu0 %1193, %v1112
        %v1195 = vpop.permute.xlu0 %1194
        %1198 = vset.pattern.permute.xlu0 0
        %1199 = vperm.xlu0 %1198, %v1113
        %v1200 = vpop.permute.xlu0 %1199
        %1203 = vset.pattern.permute.xlu0 0
        %1204 = vperm.xlu0 %1203, %v1114
        %v1205 = vpop.permute.xlu0 %1204
        %1208 = vset.pattern.permute.xlu0 0
        %1209 = vperm.xlu0 %1208, %v1115
        %v1210 = vpop.permute.xlu0 %1209
        %1213 = vset.pattern.permute.xlu0 0
        %1214 = vperm.xlu0 %1213, %v1116
        %v1215 = vpop.permute.xlu0 %1214
        %1218 = vset.pattern.permute.xlu0 0
        %1219 = vperm.xlu0 %1218, %v1117
        %v1220 = vpop.permute.xlu0 %1219
        %1223 = vset.pattern.permute.xlu0 0
        %1224 = vperm.xlu0 %1223, %v1118
        %v1225 = vpop.permute.xlu0 %1224
        %1228 = vset.pattern.permute.xlu0 0
        %1229 = vperm.xlu0 %1228, %v1119
        %v1230 = vpop.permute.xlu0 %1229
        %1233 = vset.pattern.permute.xlu0 0
        %1234 = vperm.xlu0 %1233, %v1120
        %v1235 = vpop.permute.xlu0 %1234
        %1238 = vset.pattern.permute.xlu0 0
        %1239 = vperm.xlu0 %1238, %v1121
        %v1240 = vpop.permute.xlu0 %1239
        %1243 = vset.pattern.permute.xlu0 0
        %1244 = vperm.xlu0 %1243, %v1122
        %v1245 = vpop.permute.xlu0 %1244
        %1248 = vset.pattern.permute.xlu0 0
        %1249 = vperm.xlu0 %1248, %v1123
        %v1250 = vpop.permute.xlu0 %1249
        %1253 = vset.pattern.permute.xlu0 0
        %1254 = vperm.xlu0 %1253, %v1124
        %v1255 = vpop.permute.xlu0 %1254
        %1258 = vset.pattern.permute.xlu0 0
        %1259 = vperm.xlu0 %1258, %v1125
        %v1260 = vpop.permute.xlu0 %1259
        %1263 = vset.pattern.permute.xlu0 0
        %1264 = vperm.xlu0 %1263, %v1126
        %v1265 = vpop.permute.xlu0 %1264
        %1268 = vset.pattern.permute.xlu0 0
        %1269 = vperm.xlu0 %1268, %v1127
        %v1270 = vpop.permute.xlu0 %1269
        %1273 = vset.pattern.permute.xlu0 0
        %1274 = vperm.xlu0 %1273, %v1128
        %v1275 = vpop.permute.xlu0 %1274
        %1278 = vset.pattern.permute.xlu0 0
        %1279 = vperm.xlu0 %1278, %v1129
        %v1280 = vpop.permute.xlu0 %1279
        %1283 = vset.pattern.permute.xlu0 0
        %1284 = vperm.xlu0 %1283, %v1130
        %v1285 = vpop.permute.xlu0 %1284
        %1288 = vset.pattern.permute.xlu0 0
        %1289 = vperm.xlu0 %1288, %v1131
        %v1290 = vpop.permute.xlu0 %1289
        %v1292 = vmul.f32 %v974, %v1135
        %v1293 = vmul.f32 %v977, %v1140
        %v1294 = vmul.f32 %v982, %v1145
        %v1295 = vmul.f32 %v985, %v1150
        %v1296 = vmul.f32 %v990, %v1155
        %v1297 = vmul.f32 %v993, %v1160
        %v1298 = vmul.f32 %v998, %v1165
        %v1299 = vmul.f32 %v1001, %v1170
        %v1300 = vmul.f32 %v1006, %v1175
        %v1301 = vmul.f32 %v1009, %v1180
        %v1302 = vmul.f32 %v1014, %v1185
        %v1303 = vmul.f32 %v1017, %v1190
        %v1304 = vmul.f32 %v1022, %v1195
        %v1305 = vmul.f32 %v1025, %v1200
        %v1306 = vmul.f32 %v1030, %v1205
        %v1307 = vmul.f32 %v1033, %v1210
        %v1308 = vmul.f32 %v1038, %v1215
        %v1309 = vmul.f32 %v1041, %v1220
        %v1310 = vmul.f32 %v1046, %v1225
        %v1311 = vmul.f32 %v1049, %v1230
        %v1312 = vmul.f32 %v1054, %v1235
        %v1313 = vmul.f32 %v1057, %v1240
        %v1314 = vmul.f32 %v1062, %v1245
        %v1315 = vmul.f32 %v1065, %v1250
        %v1316 = vmul.f32 %v1070, %v1255
        %v1317 = vmul.f32 %v1073, %v1260
        %v1318 = vmul.f32 %v1078, %v1265
        %v1319 = vmul.f32 %v1081, %v1270
        %v1320 = vmul.f32 %v1086, %v1275
        %v1321 = vmul.f32 %v1089, %v1280
        %v1322 = vmul.f32 %v1094, %v1285
        %v1323 = vmul.f32 %v1097, %v1290
        %v1324 = vld [vmem:[%s3] sm:$0xff]
        %v1325 = vld [vmem:[%s3 + $0x8] sm:$0xff]
        %v1326 = vld [vmem:[%s3 + $0x10] sm:$0xff]
        %v1327 = vld [vmem:[%s3 + $0x18] sm:$0xff]
        %v1328 = vld [vmem:[%s3 + $0x20] sm:$0xff]
        %v1329 = vld [vmem:[%s3 + $0x28] sm:$0xff]
        %v1330 = vld [vmem:[%s3 + $0x30] sm:$0xff]
        %v1331 = vld [vmem:[%s3 + $0x38] sm:$0xff]
        %v1332 = vld [vmem:[%s3 + $0x40] sm:$0xff]
        %v1333 = vld [vmem:[%s3 + $0x48] sm:$0xff]
        %v1334 = vld [vmem:[%s3 + $0x50] sm:$0xff]
        %v1335 = vld [vmem:[%s3 + $0x58] sm:$0xff]
        %v1336 = vld [vmem:[%s3 + $0x60] sm:$0xff]
        %v1337 = vld [vmem:[%s3 + $0x68] sm:$0xff]
        %v1338 = vld [vmem:[%s3 + $0x70] sm:$0xff]
        %v1339 = vld [vmem:[%s3 + $0x78] sm:$0xff]
        %v1340 = vld [vmem:[%s3 + $0x80] sm:$0xff]
        %v1341 = vld [vmem:[%s3 + $0x88] sm:$0xff]
        %v1342 = vld [vmem:[%s3 + $0x90] sm:$0xff]
        %v1343 = vld [vmem:[%s3 + $0x98] sm:$0xff]
        %v1344 = vld [vmem:[%s3 + $0xa0] sm:$0xff]
        %v1345 = vld [vmem:[%s3 + $0xa8] sm:$0xff]
        %v1346 = vld [vmem:[%s3 + $0xb0] sm:$0xff]
        %v1347 = vld [vmem:[%s3 + $0xb8] sm:$0xff]
        %v1348 = vld [vmem:[%s3 + $0xc0] sm:$0xff]
        %v1349 = vld [vmem:[%s3 + $0xc8] sm:$0xff]
        %v1350 = vld [vmem:[%s3 + $0xd0] sm:$0xff]
        %v1351 = vld [vmem:[%s3 + $0xd8] sm:$0xff]
        %v1352 = vld [vmem:[%s3 + $0xe0] sm:$0xff]
        %v1353 = vld [vmem:[%s3 + $0xe8] sm:$0xff]
        %v1354 = vld [vmem:[%s3 + $0xf0] sm:$0xff]
        %v1355 = vld [vmem:[%s3 + $0xf8] sm:$0xff]
        %1357 = vset.pattern.permute.xlu0 0
        %1358 = vperm.xlu0 %1357, %v1324
        %v1359 = vpop.permute.xlu0 %1358
        %1362 = vset.pattern.permute.xlu0 0
        %1363 = vperm.xlu0 %1362, %v1325
        %v1364 = vpop.permute.xlu0 %1363
        %1367 = vset.pattern.permute.xlu0 0
        %1368 = vperm.xlu0 %1367, %v1326
        %v1369 = vpop.permute.xlu0 %1368
        %1372 = vset.pattern.permute.xlu0 0
        %1373 = vperm.xlu0 %1372, %v1327
        %v1374 = vpop.permute.xlu0 %1373
        %1377 = vset.pattern.permute.xlu0 0
        %1378 = vperm.xlu0 %1377, %v1328
        %v1379 = vpop.permute.xlu0 %1378
        %1382 = vset.pattern.permute.xlu0 0
        %1383 = vperm.xlu0 %1382, %v1329
        %v1384 = vpop.permute.xlu0 %1383
        %1387 = vset.pattern.permute.xlu0 0
        %1388 = vperm.xlu0 %1387, %v1330
        %v1389 = vpop.permute.xlu0 %1388
        %1392 = vset.pattern.permute.xlu0 0
        %1393 = vperm.xlu0 %1392, %v1331
        %v1394 = vpop.permute.xlu0 %1393
        %1397 = vset.pattern.permute.xlu0 0
        %1398 = vperm.xlu0 %1397, %v1332
        %v1399 = vpop.permute.xlu0 %1398
        %1402 = vset.pattern.permute.xlu0 0
        %1403 = vperm.xlu0 %1402, %v1333
        %v1404 = vpop.permute.xlu0 %1403
        %1407 = vset.pattern.permute.xlu0 0
        %1408 = vperm.xlu0 %1407, %v1334
        %v1409 = vpop.permute.xlu0 %1408
        %1412 = vset.pattern.permute.xlu0 0
        %1413 = vperm.xlu0 %1412, %v1335
        %v1414 = vpop.permute.xlu0 %1413
        %1417 = vset.pattern.permute.xlu0 0
        %1418 = vperm.xlu0 %1417, %v1336
        %v1419 = vpop.permute.xlu0 %1418
        %1422 = vset.pattern.permute.xlu0 0
        %1423 = vperm.xlu0 %1422, %v1337
        %v1424 = vpop.permute.xlu0 %1423
        %1427 = vset.pattern.permute.xlu0 0
        %1428 = vperm.xlu0 %1427, %v1338
        %v1429 = vpop.permute.xlu0 %1428
        %1432 = vset.pattern.permute.xlu0 0
        %1433 = vperm.xlu0 %1432, %v1339
        %v1434 = vpop.permute.xlu0 %1433
        %1437 = vset.pattern.permute.xlu0 0
        %1438 = vperm.xlu0 %1437, %v1340
        %v1439 = vpop.permute.xlu0 %1438
        %1442 = vset.pattern.permute.xlu0 0
        %1443 = vperm.xlu0 %1442, %v1341
        %v1444 = vpop.permute.xlu0 %1443
        %1447 = vset.pattern.permute.xlu0 0
        %1448 = vperm.xlu0 %1447, %v1342
        %v1449 = vpop.permute.xlu0 %1448
        %1452 = vset.pattern.permute.xlu0 0
        %1453 = vperm.xlu0 %1452, %v1343
        %v1454 = vpop.permute.xlu0 %1453
        %1457 = vset.pattern.permute.xlu0 0
        %1458 = vperm.xlu0 %1457, %v1344
        %v1459 = vpop.permute.xlu0 %1458
        %1462 = vset.pattern.permute.xlu0 0
        %1463 = vperm.xlu0 %1462, %v1345
        %v1464 = vpop.permute.xlu0 %1463
        %1467 = vset.pattern.permute.xlu0 0
        %1468 = vperm.xlu0 %1467, %v1346
        %v1469 = vpop.permute.xlu0 %1468
        %1472 = vset.pattern.permute.xlu0 0
        %1473 = vperm.xlu0 %1472, %v1347
        %v1474 = vpop.permute.xlu0 %1473
        %1477 = vset.pattern.permute.xlu0 0
        %1478 = vperm.xlu0 %1477, %v1348
        %v1479 = vpop.permute.xlu0 %1478
        %1482 = vset.pattern.permute.xlu0 0
        %1483 = vperm.xlu0 %1482, %v1349
        %v1484 = vpop.permute.xlu0 %1483
        %1487 = vset.pattern.permute.xlu0 0
        %1488 = vperm.xlu0 %1487, %v1350
        %v1489 = vpop.permute.xlu0 %1488
        %1492 = vset.pattern.permute.xlu0 0
        %1493 = vperm.xlu0 %1492, %v1351
        %v1494 = vpop.permute.xlu0 %1493
        %1497 = vset.pattern.permute.xlu0 0
        %1498 = vperm.xlu0 %1497, %v1352
        %v1499 = vpop.permute.xlu0 %1498
        %1502 = vset.pattern.permute.xlu0 0
        %1503 = vperm.xlu0 %1502, %v1353
        %v1504 = vpop.permute.xlu0 %1503
        %1507 = vset.pattern.permute.xlu0 0
        %1508 = vperm.xlu0 %1507, %v1354
        %v1509 = vpop.permute.xlu0 %1508
        %1512 = vset.pattern.permute.xlu0 0
        %1513 = vperm.xlu0 %1512, %v1355
        %v1514 = vpop.permute.xlu0 %1513
        %v1516 = vadd.f32 %v1292, %v1359
        %v1517 = vadd.f32 %v1293, %v1364
        %v1518 = vadd.f32 %v1294, %v1369
        %v1519 = vadd.f32 %v1295, %v1374
        %v1520 = vadd.f32 %v1296, %v1379
        %v1521 = vadd.f32 %v1297, %v1384
        %v1522 = vadd.f32 %v1298, %v1389
        %v1523 = vadd.f32 %v1299, %v1394
        %v1524 = vadd.f32 %v1300, %v1399
        %v1525 = vadd.f32 %v1301, %v1404
        %v1526 = vadd.f32 %v1302, %v1409
        %v1527 = vadd.f32 %v1303, %v1414
        %v1528 = vadd.f32 %v1304, %v1419
        %v1529 = vadd.f32 %v1305, %v1424
        %v1530 = vadd.f32 %v1306, %v1429
        %v1531 = vadd.f32 %v1307, %v1434
        %v1532 = vadd.f32 %v1308, %v1439
        %v1533 = vadd.f32 %v1309, %v1444
        %v1534 = vadd.f32 %v1310, %v1449
        %v1535 = vadd.f32 %v1311, %v1454
        %v1536 = vadd.f32 %v1312, %v1459
        %v1537 = vadd.f32 %v1313, %v1464
        %v1538 = vadd.f32 %v1314, %v1469
        %v1539 = vadd.f32 %v1315, %v1474
        %v1540 = vadd.f32 %v1316, %v1479
        %v1541 = vadd.f32 %v1317, %v1484
        %v1542 = vadd.f32 %v1318, %v1489
        %v1543 = vadd.f32 %v1319, %v1494
        %v1544 = vadd.f32 %v1320, %v1499
        %v1545 = vadd.f32 %v1321, %v1504
        %v1546 = vadd.f32 %v1322, %v1509
        %v1547 = vadd.f32 %v1323, %v1514
        %v1548 = vmax.f32 %v1516, 0.0
        %v1549 = vmax.f32 %v1517, 0.0
        %v1550 = vmax.f32 %v1518, 0.0
        %v1551 = vmax.f32 %v1519, 0.0
        %v1552 = vmax.f32 %v1520, 0.0
        %v1553 = vmax.f32 %v1521, 0.0
        %v1554 = vmax.f32 %v1522, 0.0
        %v1555 = vmax.f32 %v1523, 0.0
        %v1556 = vmax.f32 %v1524, 0.0
        %v1557 = vmax.f32 %v1525, 0.0
        %v1558 = vmax.f32 %v1526, 0.0
        %v1559 = vmax.f32 %v1527, 0.0
        %v1560 = vmax.f32 %v1528, 0.0
        %v1561 = vmax.f32 %v1529, 0.0
        %v1562 = vmax.f32 %v1530, 0.0
        %v1563 = vmax.f32 %v1531, 0.0
        %v1564 = vmax.f32 %v1532, 0.0
        %v1565 = vmax.f32 %v1533, 0.0
        %v1566 = vmax.f32 %v1534, 0.0
        %v1567 = vmax.f32 %v1535, 0.0
        %v1568 = vmax.f32 %v1536, 0.0
        %v1569 = vmax.f32 %v1537, 0.0
        %v1570 = vmax.f32 %v1538, 0.0
        %v1571 = vmax.f32 %v1539, 0.0
        %v1572 = vmax.f32 %v1540, 0.0
        %v1573 = vmax.f32 %v1541, 0.0
        %v1574 = vmax.f32 %v1542, 0.0
        %v1575 = vmax.f32 %v1543, 0.0
        %v1576 = vmax.f32 %v1544, 0.0
        %v1577 = vmax.f32 %v1545, 0.0
        %v1578 = vmax.f32 %v1546, 0.0
        %v1579 = vmax.f32 %v1547, 0.0
        %v1580 = vld [vmem:[%s4] sm:$0xff]
        %v1581 = vld [vmem:[%s4 + $0x8] sm:$0xff]
        %v1582 = vld [vmem:[%s4 + $0x10] sm:$0xff]
        %v1583 = vld [vmem:[%s4 + $0x18] sm:$0xff]
        %v1584 = vld [vmem:[%s4 + $0x20] sm:$0xff]
        %v1585 = vld [vmem:[%s4 + $0x28] sm:$0xff]
        %v1586 = vld [vmem:[%s4 + $0x30] sm:$0xff]
        %v1587 = vld [vmem:[%s4 + $0x38] sm:$0xff]
        %v1588 = vld [vmem:[%s4 + $0x40] sm:$0xff]
        %v1589 = vld [vmem:[%s4 + $0x48] sm:$0xff]
        %v1590 = vld [vmem:[%s4 + $0x50] sm:$0xff]
        %v1591 = vld [vmem:[%s4 + $0x58] sm:$0xff]
        %v1592 = vld [vmem:[%s4 + $0x60] sm:$0xff]
        %v1593 = vld [vmem:[%s4 + $0x68] sm:$0xff]
        %v1594 = vld [vmem:[%s4 + $0x70] sm:$0xff]
        %v1595 = vld [vmem:[%s4 + $0x78] sm:$0xff]
        %v1596 = vpack.c.bf16 %v1549, %v1548
        %v1597 = vpack.c.bf16 %v1551, %v1550
        %v1598 = vpack.c.bf16 %v1553, %v1552
        %v1599 = vpack.c.bf16 %v1555, %v1554
        %v1600 = vpack.c.bf16 %v1557, %v1556
        %v1601 = vpack.c.bf16 %v1559, %v1558
        %v1602 = vpack.c.bf16 %v1561, %v1560
        %v1603 = vpack.c.bf16 %v1563, %v1562
        %v1604 = vpack.c.bf16 %v1565, %v1564
        %v1605 = vpack.c.bf16 %v1567, %v1566
        %v1606 = vpack.c.bf16 %v1569, %v1568
        %v1607 = vpack.c.bf16 %v1571, %v1570
        %v1608 = vpack.c.bf16 %v1573, %v1572
        %v1609 = vpack.c.bf16 %v1575, %v1574
        %v1610 = vpack.c.bf16 %v1577, %v1576
        %v1611 = vpack.c.bf16 %v1579, %v1578
        %v1628 = vunpack.c.l.b16 %v1580
        %v1629 = vunpack.c.h.b16 %v1580
        %v1630 = vunpack.c.l.b16 %v1581
        %v1631 = vunpack.c.h.b16 %v1581
        %v1632 = vunpack.c.l.b16 %v1582
        %v1633 = vunpack.c.h.b16 %v1582
        %v1634 = vunpack.c.l.b16 %v1583
        %v1635 = vunpack.c.h.b16 %v1583
        %v1636 = vunpack.c.l.b16 %v1584
        %v1637 = vunpack.c.h.b16 %v1584
        %v1638 = vunpack.c.l.b16 %v1585
        %v1639 = vunpack.c.h.b16 %v1585
        %v1640 = vunpack.c.l.b16 %v1586
        %v1641 = vunpack.c.h.b16 %v1586
        %v1642 = vunpack.c.l.b16 %v1587
        %v1643 = vunpack.c.h.b16 %v1587
        %v1644 = vunpack.c.l.b16 %v1588
        %v1645 = vunpack.c.h.b16 %v1588
        %v1646 = vunpack.c.l.b16 %v1589
        %v1647 = vunpack.c.h.b16 %v1589
        %v1648 = vunpack.c.l.b16 %v1590
        %v1649 = vunpack.c.h.b16 %v1590
        %v1650 = vunpack.c.l.b16 %v1591
        %v1651 = vunpack.c.h.b16 %v1591
        %v1652 = vunpack.c.l.b16 %v1592
        %v1653 = vunpack.c.h.b16 %v1592
        %v1654 = vunpack.c.l.b16 %v1593
        %v1655 = vunpack.c.h.b16 %v1593
        %v1656 = vunpack.c.l.b16 %v1594
        %v1657 = vunpack.c.h.b16 %v1594
        %v1658 = vunpack.c.l.b16 %v1595
        %v1659 = vunpack.c.h.b16 %v1595
        %v1660 = vpack.c.b16 %v1630, %v1628
        %v1661 = vpack.c.b16 %v1631, %v1629
        %v1662 = vpack.c.b16 %v1634, %v1632
        %v1663 = vpack.c.b16 %v1635, %v1633
        %v1664 = vpack.c.b16 %v1638, %v1636
        %v1665 = vpack.c.b16 %v1639, %v1637
        %v1666 = vpack.c.b16 %v1642, %v1640
        %v1667 = vpack.c.b16 %v1643, %v1641
        %v1668 = vpack.c.b16 %v1646, %v1644
        %v1669 = vpack.c.b16 %v1647, %v1645
        %v1670 = vpack.c.b16 %v1650, %v1648
        %v1671 = vpack.c.b16 %v1651, %v1649
        %v1672 = vpack.c.b16 %v1654, %v1652
        %v1673 = vpack.c.b16 %v1655, %v1653
        %v1674 = vpack.c.b16 %v1658, %v1656
        %v1675 = vpack.c.b16 %v1659, %v1657
        %1692 = vmatprep.subr.bf16.mxu0 0
        %1693 = vmatpush1.bf16.msra.mxu0 %v1596
        %1694 = vmatprep.subr.bf16.mxu0 0
        %1695 = vmatpush1.bf16.msra.mxu0 %v1597
        %1696 = vmatprep.subr.bf16.mxu0 0
        %1697 = vmatpush1.bf16.msra.mxu0 %v1598
        %1698 = vmatprep.subr.bf16.mxu0 0
        %1699 = vmatpush1.bf16.msra.mxu0 %v1599
        %1700 = vmatprep.subr.bf16.mxu0 0
        %1701 = vmatpush1.bf16.msra.mxu0 %v1600
        %1702 = vmatprep.subr.bf16.mxu0 0
        %1703 = vmatpush1.bf16.msra.mxu0 %v1601
        %1704 = vmatprep.subr.bf16.mxu0 0
        %1705 = vmatpush1.bf16.msra.mxu0 %v1602
        %1706 = vmatprep.subr.bf16.mxu0 0
        %1707 = vmatpush1.bf16.msra.mxu0 %v1603
        %1708 = vmatprep.subr.bf16.mxu0 0
        %1709 = vmatpush1.bf16.msra.mxu0 %v1604
        %1710 = vmatprep.subr.bf16.mxu0 0
        %1711 = vmatpush1.bf16.msra.mxu0 %v1605
        %1712 = vmatprep.subr.bf16.mxu0 0
        %1713 = vmatpush1.bf16.msra.mxu0 %v1606
        %1714 = vmatprep.subr.bf16.mxu0 0
        %1715 = vmatpush1.bf16.msra.mxu0 %v1607
        %1716 = vmatprep.subr.bf16.mxu0 0
        %1717 = vmatpush1.bf16.msra.mxu0 %v1608
        %1718 = vmatprep.subr.bf16.mxu0 0
        %1719 = vmatpush1.bf16.msra.mxu0 %v1609
        %1720 = vmatprep.subr.bf16.mxu0 0
        %1721 = vmatpush1.bf16.msra.mxu0 %v1610
        %1722 = vmatprep.subr.bf16.mxu0 0
        %1723 = vmatpush1.bf16.msra.mxu0 %v1611
        %1724 = vmatprep.mubr.bf16.mxu0 %v1661
        %1725 = vmatmul.mubr.bf16.gmra.mrb[0].mxu0 %v1660
        %v1726 = vpop.f32.mrb[0].mxu0
        %v1727 = vadd.f32 0.0, %v1726
        %v1728 = vpop.f32.mrb[0].mxu0
        %v1729 = vpop.f32.mrb[0].mxu0
        %v1730 = vadd.f32 0.0, %v1729
        %v1731 = vpop.f32.mrb[0].mxu0
        %1732 = vmatprep.mubr.bf16.mxu0 %v1663
        %1733 = vmatmul.mubr.bf16.gmra.mrb[0].mxu0 %v1662
        %v1734 = vpop.f32.mrb[0].mxu0
        %v1735 = vadd.f32 0.0, %v1734
        %v1736 = vpop.f32.mrb[0].mxu0
        %v1737 = vpop.f32.mrb[0].mxu0
        %v1738 = vadd.f32 0.0, %v1737
        %v1739 = vpop.f32.mrb[0].mxu0
        %1740 = vmatprep.mubr.bf16.mxu0 %v1665
        %1741 = vmatmul.mubr.bf16.gmra.mrb[0].mxu0 %v1664
        %v1742 = vpop.f32.mrb[0].mxu0
        %v1743 = vadd.f32 0.0, %v1742
        %v1744 = vpop.f32.mrb[0].mxu0
        %v1745 = vpop.f32.mrb[0].mxu0
        %v1746 = vadd.f32 0.0, %v1745
        %v1747 = vpop.f32.mrb[0].mxu0
        %1748 = vmatprep.mubr.bf16.mxu0 %v1667
        %1749 = vmatmul.mubr.bf16.gmra.mrb[0].mxu0 %v1666
        %v1750 = vpop.f32.mrb[0].mxu0
        %v1751 = vadd.f32 0.0, %v1750
        %v1752 = vpop.f32.mrb[0].mxu0
        %v1753 = vpop.f32.mrb[0].mxu0
        %v1754 = vadd.f32 0.0, %v1753
        %v1755 = vpop.f32.mrb[0].mxu0
        %1756 = vmatprep.mubr.bf16.mxu0 %v1669
        %1757 = vmatmul.mubr.bf16.gmra.mrb[0].mxu0 %v1668
        %v1758 = vpop.f32.mrb[0].mxu0
        %v1759 = vadd.f32 0.0, %v1758
        %v1760 = vpop.f32.mrb[0].mxu0
        %v1761 = vpop.f32.mrb[0].mxu0
        %v1762 = vadd.f32 0.0, %v1761
        %v1763 = vpop.f32.mrb[0].mxu0
        %1764 = vmatprep.mubr.bf16.mxu0 %v1671
        %1765 = vmatmul.mubr.bf16.gmra.mrb[0].mxu0 %v1670
        %v1766 = vpop.f32.mrb[0].mxu0
        %v1767 = vadd.f32 0.0, %v1766
        %v1768 = vpop.f32.mrb[0].mxu0
        %v1769 = vpop.f32.mrb[0].mxu0
        %v1770 = vadd.f32 0.0, %v1769
        %v1771 = vpop.f32.mrb[0].mxu0
        %1772 = vmatprep.mubr.bf16.mxu0 %v1673
        %1773 = vmatmul.mubr.bf16.gmra.mrb[0].mxu0 %v1672
        %v1774 = vpop.f32.mrb[0].mxu0
        %v1775 = vadd.f32 0.0, %v1774
        %v1776 = vpop.f32.mrb[0].mxu0
        %v1777 = vpop.f32.mrb[0].mxu0
        %v1778 = vadd.f32 0.0, %v1777
        %v1779 = vpop.f32.mrb[0].mxu0
        %1780 = vmatprep.mubr.bf16.mxu0 %v1675
        %1781 = vmatmul.mubr.bf16.gmra.mrb[0].mxu0 %v1674
        %v1782 = vpop.f32.mrb[0].mxu0
        %v1783 = vadd.f32 0.0, %v1782
        %v1784 = vpop.f32.mrb[0].mxu0
        %v1785 = vpop.f32.mrb[0].mxu0
        %v1786 = vadd.f32 0.0, %v1785
        %v1787 = vpop.f32.mrb[0].mxu0
        %1788 = vdwg.mxu0
        %v1789 = vld [vmem:[%s5] sm:$0xff]
        %v1790 = vld [vmem:[%s5 + $0x8] sm:$0xff]
        %v1791 = vld [vmem:[%s5 + $0x10] sm:$0xff]
        %v1792 = vld [vmem:[%s5 + $0x18] sm:$0xff]
        %v1793 = vld [vmem:[%s5 + $0x20] sm:$0xff]
        %v1794 = vld [vmem:[%s5 + $0x28] sm:$0xff]
        %v1795 = vld [vmem:[%s5 + $0x30] sm:$0xff]
        %v1796 = vld [vmem:[%s5 + $0x38] sm:$0xff]
        %v1797 = vld [vmem:[%s5 + $0x40] sm:$0xff]
        %v1798 = vld [vmem:[%s5 + $0x48] sm:$0xff]
        %v1799 = vld [vmem:[%s5 + $0x50] sm:$0xff]
        %v1800 = vld [vmem:[%s5 + $0x58] sm:$0xff]
        %v1801 = vld [vmem:[%s5 + $0x60] sm:$0xff]
        %v1802 = vld [vmem:[%s5 + $0x68] sm:$0xff]
        %v1803 = vld [vmem:[%s5 + $0x70] sm:$0xff]
        %v1804 = vld [vmem:[%s5 + $0x78] sm:$0xff]
        %1806 = vset.pattern.permute.xlu0 0
        %1807 = vperm.xlu0 %1806, %v1789
        %v1808 = vpop.permute.xlu0 %1807
        %1811 = vset.pattern.permute.xlu0 0
        %1812 = vperm.xlu0 %1811, %v1790
        %v1813 = vpop.permute.xlu0 %1812
        %1816 = vset.pattern.permute.xlu0 0
        %1817 = vperm.xlu0 %1816, %v1791
        %v1818 = vpop.permute.xlu0 %1817
        %1821 = vset.pattern.permute.xlu0 0
        %1822 = vperm.xlu0 %1821, %v1792
        %v1823 = vpop.permute.xlu0 %1822
        %1826 = vset.pattern.permute.xlu0 0
        %1827 = vperm.xlu0 %1826, %v1793
        %v1828 = vpop.permute.xlu0 %1827
        %1831 = vset.pattern.permute.xlu0 0
        %1832 = vperm.xlu0 %1831, %v1794
        %v1833 = vpop.permute.xlu0 %1832
        %1836 = vset.pattern.permute.xlu0 0
        %1837 = vperm.xlu0 %1836, %v1795
        %v1838 = vpop.permute.xlu0 %1837
        %1841 = vset.pattern.permute.xlu0 0
        %1842 = vperm.xlu0 %1841, %v1796
        %v1843 = vpop.permute.xlu0 %1842
        %1846 = vset.pattern.permute.xlu0 0
        %1847 = vperm.xlu0 %1846, %v1797
        %v1848 = vpop.permute.xlu0 %1847
        %1851 = vset.pattern.permute.xlu0 0
        %1852 = vperm.xlu0 %1851, %v1798
        %v1853 = vpop.permute.xlu0 %1852
        %1856 = vset.pattern.permute.xlu0 0
        %1857 = vperm.xlu0 %1856, %v1799
        %v1858 = vpop.permute.xlu0 %1857
        %1861 = vset.pattern.permute.xlu0 0
        %1862 = vperm.xlu0 %1861, %v1800
        %v1863 = vpop.permute.xlu0 %1862
        %1866 = vset.pattern.permute.xlu0 0
        %1867 = vperm.xlu0 %1866, %v1801
        %v1868 = vpop.permute.xlu0 %1867
        %1871 = vset.pattern.permute.xlu0 0
        %1872 = vperm.xlu0 %1871, %v1802
        %v1873 = vpop.permute.xlu0 %1872
        %1876 = vset.pattern.permute.xlu0 0
        %1877 = vperm.xlu0 %1876, %v1803
        %v1878 = vpop.permute.xlu0 %1877
        %1881 = vset.pattern.permute.xlu0 0
        %1882 = vperm.xlu0 %1881, %v1804
        %v1883 = vpop.permute.xlu0 %1882
        %v1885 = vmul.f32 %v1727, %v1808
        %v1886 = vmul.f32 %v1730, %v1813
        %v1887 = vmul.f32 %v1735, %v1818
        %v1888 = vmul.f32 %v1738, %v1823
        %v1889 = vmul.f32 %v1743, %v1828
        %v1890 = vmul.f32 %v1746, %v1833
        %v1891 = vmul.f32 %v1751, %v1838
        %v1892 = vmul.f32 %v1754, %v1843
        %v1893 = vmul.f32 %v1759, %v1848
        %v1894 = vmul.f32 %v1762, %v1853
        %v1895 = vmul.f32 %v1767, %v1858
        %v1896 = vmul.f32 %v1770, %v1863
        %v1897 = vmul.f32 %v1775, %v1868
        %v1898 = vmul.f32 %v1778, %v1873
        %v1899 = vmul.f32 %v1783, %v1878
        %v1900 = vmul.f32 %v1786, %v1883
        %v1901 = vld [vmem:[%s6] sm:$0xff]
        %v1902 = vld [vmem:[%s6 + $0x8] sm:$0xff]
        %v1903 = vld [vmem:[%s6 + $0x10] sm:$0xff]
        %v1904 = vld [vmem:[%s6 + $0x18] sm:$0xff]
        %v1905 = vld [vmem:[%s6 + $0x20] sm:$0xff]
        %v1906 = vld [vmem:[%s6 + $0x28] sm:$0xff]
        %v1907 = vld [vmem:[%s6 + $0x30] sm:$0xff]
        %v1908 = vld [vmem:[%s6 + $0x38] sm:$0xff]
        %v1909 = vld [vmem:[%s6 + $0x40] sm:$0xff]
        %v1910 = vld [vmem:[%s6 + $0x48] sm:$0xff]
        %v1911 = vld [vmem:[%s6 + $0x50] sm:$0xff]
        %v1912 = vld [vmem:[%s6 + $0x58] sm:$0xff]
        %v1913 = vld [vmem:[%s6 + $0x60] sm:$0xff]
        %v1914 = vld [vmem:[%s6 + $0x68] sm:$0xff]
        %v1915 = vld [vmem:[%s6 + $0x70] sm:$0xff]
        %v1916 = vld [vmem:[%s6 + $0x78] sm:$0xff]
        %1918 = vset.pattern.permute.xlu0 0
        %1919 = vperm.xlu0 %1918, %v1901
        %v1920 = vpop.permute.xlu0 %1919
        %1923 = vset.pattern.permute.xlu0 0
        %1924 = vperm.xlu0 %1923, %v1902
        %v1925 = vpop.permute.xlu0 %1924
        %1928 = vset.pattern.permute.xlu0 0
        %1929 = vperm.xlu0 %1928, %v1903
        %v1930 = vpop.permute.xlu0 %1929
        %1933 = vset.pattern.permute.xlu0 0
        %1934 = vperm.xlu0 %1933, %v1904
        %v1935 = vpop.permute.xlu0 %1934
        %1938 = vset.pattern.permute.xlu0 0
        %1939 = vperm.xlu0 %1938, %v1905
        %v1940 = vpop.permute.xlu0 %1939
        %1943 = vset.pattern.permute.xlu0 0
        %1944 = vperm.xlu0 %1943, %v1906
        %v1945 = vpop.permute.xlu0 %1944
        %1948 = vset.pattern.permute.xlu0 0
        %1949 = vperm.xlu0 %1948, %v1907
        %v1950 = vpop.permute.xlu0 %1949
        %1953 = vset.pattern.permute.xlu0 0
        %1954 = vperm.xlu0 %1953, %v1908
        %v1955 = vpop.permute.xlu0 %1954
        %1958 = vset.pattern.permute.xlu0 0
        %1959 = vperm.xlu0 %1958, %v1909
        %v1960 = vpop.permute.xlu0 %1959
        %1963 = vset.pattern.permute.xlu0 0
        %1964 = vperm.xlu0 %1963, %v1910
        %v1965 = vpop.permute.xlu0 %1964
        %1968 = vset.pattern.permute.xlu0 0
        %1969 = vperm.xlu0 %1968, %v1911
        %v1970 = vpop.permute.xlu0 %1969
        %1973 = vset.pattern.permute.xlu0 0
        %1974 = vperm.xlu0 %1973, %v1912
        %v1975 = vpop.permute.xlu0 %1974
        %1978 = vset.pattern.permute.xlu0 0
        %1979 = vperm.xlu0 %1978, %v1913
        %v1980 = vpop.permute.xlu0 %1979
        %1983 = vset.pattern.permute.xlu0 0
        %1984 = vperm.xlu0 %1983, %v1914
        %v1985 = vpop.permute.xlu0 %1984
        %1988 = vset.pattern.permute.xlu0 0
        %1989 = vperm.xlu0 %1988, %v1915
        %v1990 = vpop.permute.xlu0 %1989
        %1993 = vset.pattern.permute.xlu0 0
        %1994 = vperm.xlu0 %1993, %v1916
        %v1995 = vpop.permute.xlu0 %1994
        %v1997 = vadd.f32 %v1885, %v1920
        %v1998 = vadd.f32 %v1886, %v1925
        %v1999 = vadd.f32 %v1887, %v1930
        %v2000 = vadd.f32 %v1888, %v1935
        %v2001 = vadd.f32 %v1889, %v1940
        %v2002 = vadd.f32 %v1890, %v1945
        %v2003 = vadd.f32 %v1891, %v1950
        %v2004 = vadd.f32 %v1892, %v1955
        %v2005 = vadd.f32 %v1893, %v1960
        %v2006 = vadd.f32 %v1894, %v1965
        %v2007 = vadd.f32 %v1895, %v1970
        %v2008 = vadd.f32 %v1896, %v1975
        %v2009 = vadd.f32 %v1897, %v1980
        %v2010 = vadd.f32 %v1898, %v1985
        %v2011 = vadd.f32 %v1899, %v1990
        %v2012 = vadd.f32 %v1900, %v1995
        %v2013 = vmax.f32 %v1997, 0.0
        %v2014 = vmax.f32 %v1998, 0.0
        %v2015 = vmax.f32 %v1999, 0.0
        %v2016 = vmax.f32 %v2000, 0.0
        %v2017 = vmax.f32 %v2001, 0.0
        %v2018 = vmax.f32 %v2002, 0.0
        %v2019 = vmax.f32 %v2003, 0.0
        %v2020 = vmax.f32 %v2004, 0.0
        %v2021 = vmax.f32 %v2005, 0.0
        %v2022 = vmax.f32 %v2006, 0.0
        %v2023 = vmax.f32 %v2007, 0.0
        %v2024 = vmax.f32 %v2008, 0.0
        %v2025 = vmax.f32 %v2009, 0.0
        %v2026 = vmax.f32 %v2010, 0.0
        %v2027 = vmax.f32 %v2011, 0.0
        %v2028 = vmax.f32 %v2012, 0.0
        %v2029 = vld [vmem:[#allocation3] sm:$0xf]
        %v2030 = vld [vmem:[#allocation3 + $0x4] sm:$0xf]
        %v2031 = vld [vmem:[#allocation3 + $0x8] sm:$0xf]
        %v2032 = vld [vmem:[#allocation3 + $0xc] sm:$0xf]
        %v2033 = vld [vmem:[#allocation3 + $0x10] sm:$0xf]
        %v2034 = vld [vmem:[#allocation3 + $0x14] sm:$0xf]
        %v2035 = vld [vmem:[#allocation3 + $0x18] sm:$0xf]
        %v2036 = vld [vmem:[#allocation3 + $0x1c] sm:$0xf]
        %v2037 = vpack.c.bf16 %v2014, %v2013
        %v2038 = vpack.c.bf16 %v2016, %v2015
        %v2039 = vpack.c.bf16 %v2018, %v2017
        %v2040 = vpack.c.bf16 %v2020, %v2019
        %v2041 = vpack.c.bf16 %v2022, %v2021
        %v2042 = vpack.c.bf16 %v2024, %v2023
        %v2043 = vpack.c.bf16 %v2026, %v2025
        %v2044 = vpack.c.bf16 %v2028, %v2027
        %v2053 = vunpack.c.l.b16 %v2029
        %v2054 = vunpack.c.l.b16 %v2030
        %v2055 = vunpack.c.l.b16 %v2031
        %v2056 = vunpack.c.l.b16 %v2032
        %v2057 = vunpack.c.l.b16 %v2033
        %v2058 = vunpack.c.l.b16 %v2034
        %v2059 = vunpack.c.l.b16 %v2035
        %v2060 = vunpack.c.l.b16 %v2036
        %v2061 = vpack.c.b16 %v2054, %v2053
        %v2062 = vpack.c.b16 %v2056, %v2055
        %v2063 = vpack.c.b16 %v2058, %v2057
        %v2064 = vpack.c.b16 %v2060, %v2059
        %2069 = vmatprep.subr.bf16.mxu0 0
        %2070 = vmatpush1.bf16.msra.mxu0 %v2037
        %2071 = vmatprep.subr.bf16.mxu0 0
        %2072 = vmatpush1.bf16.msra.mxu0 %v2038
        %2073 = vmatprep.subr.bf16.mxu0 0
        %2074 = vmatpush1.bf16.msra.mxu0 %v2039
        %2075 = vmatprep.subr.bf16.mxu0 0
        %2076 = vmatpush1.bf16.msra.mxu0 %v2040
        %2077 = vmatprep.subr.bf16.mxu0 0
        %2078 = vmatpush1.bf16.msra.mxu0 %v2041
        %2079 = vmatprep.subr.bf16.mxu0 0
        %2080 = vmatpush1.bf16.msra.mxu0 %v2042
        %2081 = vmatprep.subr.bf16.mxu0 0
        %2082 = vmatpush1.bf16.msra.mxu0 %v2043
        %2083 = vmatprep.subr.bf16.mxu0 0
        %2084 = vmatpush1.bf16.msra.mxu0 %v2044
        %2085 = vmatprep.subr.bf16.mxu0 0
        %2086 = vmatpush1.bf16.msra.mxu0 0
        %2087 = vmatprep.subr.bf16.mxu0 0
        %2088 = vmatpush1.bf16.msra.mxu0 0
        %2089 = vmatprep.subr.bf16.mxu0 0
        %2090 = vmatpush1.bf16.msra.mxu0 0
        %2091 = vmatprep.subr.bf16.mxu0 0
        %2092 = vmatpush1.bf16.msra.mxu0 0
        %2093 = vmatprep.subr.bf16.mxu0 0
        %2094 = vmatpush1.bf16.msra.mxu0 0
        %2095 = vmatprep.subr.bf16.mxu0 0
        %2096 = vmatpush1.bf16.msra.mxu0 0
        %2097 = vmatprep.subr.bf16.mxu0 0
        %2098 = vmatpush1.bf16.msra.mxu0 0
        %2099 = vmatprep.subr.bf16.mxu0 0
        %2100 = vmatpush1.bf16.msra.mxu0 0
        %2101 = vmatprep.mubr.bf16.mxu0 0
        %2102 = vmatmul.mubr.bf16.gmra.mrb[0].mxu0 %v2061
        %v2103 = vpop.f32.mrb[0].mxu0
        %v2104 = vadd.f32 0.0, %v2103
        %v2105 = vpop.f32.mrb[0].mxu0
        %v2106 = vpop.f32.mrb[0].mxu0
        %v2107 = vadd.f32 0.0, %v2106
        %v2108 = vpop.f32.mrb[0].mxu0
        %2109 = vmatprep.mubr.bf16.mxu0 0
        %2110 = vmatmul.mubr.bf16.gmra.mrb[0].mxu0 %v2062
        %v2111 = vpop.f32.mrb[0].mxu0
        %v2112 = vadd.f32 0.0, %v2111
        %v2113 = vpop.f32.mrb[0].mxu0
        %v2114 = vpop.f32.mrb[0].mxu0
        %v2115 = vadd.f32 0.0, %v2114
        %v2116 = vpop.f32.mrb[0].mxu0
        %2117 = vmatprep.mubr.bf16.mxu0 0
        %2118 = vmatmul.mubr.bf16.gmra.mrb[0].mxu0 %v2063
        %v2119 = vpop.f32.mrb[0].mxu0
        %v2120 = vadd.f32 0.0, %v2119
        %v2121 = vpop.f32.mrb[0].mxu0
        %v2122 = vpop.f32.mrb[0].mxu0
        %v2123 = vadd.f32 0.0, %v2122
        %v2124 = vpop.f32.mrb[0].mxu0
        %2125 = vmatprep.mubr.bf16.mxu0 0
        %2126 = vmatmul.mubr.bf16.gmra.mrb[0].mxu0 %v2064
        %v2127 = vpop.f32.mrb[0].mxu0
        %v2128 = vadd.f32 0.0, %v2127
        %v2129 = vpop.f32.mrb[0].mxu0
        %v2130 = vpop.f32.mrb[0].mxu0
        %v2131 = vadd.f32 0.0, %v2130
        %v2132 = vpop.f32.mrb[0].mxu0
        %2133 = vdwg.mxu0
        %v2134 = vld [vmem:[%s8] sm:$0xff]
        %v2135 = vld [vmem:[%s8 + $0x8] sm:$0xff]
        %v2136 = vld [vmem:[%s8 + $0x10] sm:$0xff]
        %v2137 = vld [vmem:[%s8 + $0x18] sm:$0xff]
        %v2138 = vld [vmem:[%s8 + $0x20] sm:$0xff]
        %v2139 = vld [vmem:[%s8 + $0x28] sm:$0xff]
        %v2140 = vld [vmem:[%s8 + $0x30] sm:$0xff]
        %v2141 = vld [vmem:[%s8 + $0x38] sm:$0xff]
        %2143 = vset.pattern.permute.xlu0 0
        %2144 = vperm.xlu0 %2143, %v2134
        %v2145 = vpop.permute.xlu0 %2144
        %2148 = vset.pattern.permute.xlu0 0
        %2149 = vperm.xlu0 %2148, %v2135
        %v2150 = vpop.permute.xlu0 %2149
        %2153 = vset.pattern.permute.xlu0 0
        %2154 = vperm.xlu0 %2153, %v2136
        %v2155 = vpop.permute.xlu0 %2154
        %2158 = vset.pattern.permute.xlu0 0
        %2159 = vperm.xlu0 %2158, %v2137
        %v2160 = vpop.permute.xlu0 %2159
        %2163 = vset.pattern.permute.xlu0 0
        %2164 = vperm.xlu0 %2163, %v2138
        %v2165 = vpop.permute.xlu0 %2164
        %2168 = vset.pattern.permute.xlu0 0
        %2169 = vperm.xlu0 %2168, %v2139
        %v2170 = vpop.permute.xlu0 %2169
        %2173 = vset.pattern.permute.xlu0 0
        %2174 = vperm.xlu0 %2173, %v2140
        %v2175 = vpop.permute.xlu0 %2174
        %2178 = vset.pattern.permute.xlu0 0
        %2179 = vperm.xlu0 %2178, %v2141
        %v2180 = vpop.permute.xlu0 %2179
        %v2182 = vmul.f32 %v2104, %v2145
        %v2183 = vmul.f32 %v2107, %v2150
        %v2184 = vmul.f32 %v2112, %v2155
        %v2185 = vmul.f32 %v2115, %v2160
        %v2186 = vmul.f32 %v2120, %v2165
        %v2187 = vmul.f32 %v2123, %v2170
        %v2188 = vmul.f32 %v2128, %v2175
        %v2189 = vmul.f32 %v2131, %v2180
        %v2190 = vld [vmem:[%s9] sm:$0xff]
        %v2191 = vld [vmem:[%s9 + $0x8] sm:$0xff]
        %v2192 = vld [vmem:[%s9 + $0x10] sm:$0xff]
        %v2193 = vld [vmem:[%s9 + $0x18] sm:$0xff]
        %v2194 = vld [vmem:[%s9 + $0x20] sm:$0xff]
        %v2195 = vld [vmem:[%s9 + $0x28] sm:$0xff]
        %v2196 = vld [vmem:[%s9 + $0x30] sm:$0xff]
        %v2197 = vld [vmem:[%s9 + $0x38] sm:$0xff]
        %2199 = vset.pattern.permute.xlu0 0
        %2200 = vperm.xlu0 %2199, %v2190
        %v2201 = vpop.permute.xlu0 %2200
        %2204 = vset.pattern.permute.xlu0 0
        %2205 = vperm.xlu0 %2204, %v2191
        %v2206 = vpop.permute.xlu0 %2205
        %2209 = vset.pattern.permute.xlu0 0
        %2210 = vperm.xlu0 %2209, %v2192
        %v2211 = vpop.permute.xlu0 %2210
        %2214 = vset.pattern.permute.xlu0 0
        %2215 = vperm.xlu0 %2214, %v2193
        %v2216 = vpop.permute.xlu0 %2215
        %2219 = vset.pattern.permute.xlu0 0
        %2220 = vperm.xlu0 %2219, %v2194
        %v2221 = vpop.permute.xlu0 %2220
        %2224 = vset.pattern.permute.xlu0 0
        %2225 = vperm.xlu0 %2224, %v2195
        %v2226 = vpop.permute.xlu0 %2225
        %2229 = vset.pattern.permute.xlu0 0
        %2230 = vperm.xlu0 %2229, %v2196
        %v2231 = vpop.permute.xlu0 %2230
        %2234 = vset.pattern.permute.xlu0 0
        %2235 = vperm.xlu0 %2234, %v2197
        %v2236 = vpop.permute.xlu0 %2235
        %v2238 = vadd.f32 %v2182, %v2201
        %v2239 = vadd.f32 %v2183, %v2206
        %v2240 = vadd.f32 %v2184, %v2211
        %v2241 = vadd.f32 %v2185, %v2216
        %v2242 = vadd.f32 %v2186, %v2221
        %v2243 = vadd.f32 %v2187, %v2226
        %v2244 = vadd.f32 %v2188, %v2231
        %v2245 = vadd.f32 %v2189, %v2236
        %v2246 = vmax.f32 %v2238, 0.0
        %v2247 = vmax.f32 %v2239, 0.0
        %v2248 = vmax.f32 %v2240, 0.0
        %v2249 = vmax.f32 %v2241, 0.0
        %v2250 = vmax.f32 %v2242, 0.0
        %v2251 = vmax.f32 %v2243, 0.0
        %v2252 = vmax.f32 %v2244, 0.0
        %v2253 = vmax.f32 %v2245, 0.0
        %v2254 = vld [vmem:[%s10] sm:$0x3]
        %v2255 = vpack.c.bf16 %v2247, %v2246
        %v2256 = vpack.c.bf16 %v2249, %v2248
        %v2257 = vpack.c.bf16 %v2251, %v2250
        %v2258 = vpack.c.bf16 %v2253, %v2252
        %v2259 = vld [vmem:[%s11] sm:$0x7]
        %2261 = vset.pattern.permute.xlu0 0
        %2262 = vperm.xlu0 %2261, %v2259
        %v2263 = vpop.permute.xlu0 %2262
        %vm2265 = vcmask 523264
        %v2267 = vsel %vm2265, %v2254, 0
        %2269 = vmatprep.subr.bf16.mxu0 0
        %2270 = vmatpush1.bf16.msra.mxu0 %v2255
        %2271 = vmatprep.subr.bf16.mxu0 0
        %2272 = vmatpush1.bf16.msra.mxu0 %v2256
        %2273 = vmatprep.subr.bf16.mxu0 0
        %2274 = vmatpush1.bf16.msra.mxu0 %v2257
        %2275 = vmatprep.subr.bf16.mxu0 0
        %2276 = vmatpush1.bf16.msra.mxu0 %v2258
        %2277 = vmatprep.subr.bf16.mxu0 0
        %2278 = vmatpush1.bf16.msra.mxu0 0
        %2279 = vmatprep.subr.bf16.mxu0 0
        %2280 = vmatpush1.bf16.msra.mxu0 0
        %2281 = vmatprep.subr.bf16.mxu0 0
        %2282 = vmatpush1.bf16.msra.mxu0 0
        %2283 = vmatprep.subr.bf16.mxu0 0
        %2284 = vmatpush1.bf16.msra.mxu0 0
        %2285 = vmatprep.subr.bf16.mxu0 0
        %2286 = vmatpush1.bf16.msra.mxu0 0
        %2287 = vmatprep.subr.bf16.mxu0 0
        %2288 = vmatpush1.bf16.msra.mxu0 0
        %2289 = vmatprep.subr.bf16.mxu0 0
        %2290 = vmatpush1.bf16.msra.mxu0 0
        %2291 = vmatprep.subr.bf16.mxu0 0
        %2292 = vmatpush1.bf16.msra.mxu0 0
        %2293 = vmatprep.subr.bf16.mxu0 0
        %2294 = vmatpush1.bf16.msra.mxu0 0
        %2295 = vmatprep.subr.bf16.mxu0 0
        %2296 = vmatpush1.bf16.msra.mxu0 0
        %2297 = vmatprep.subr.bf16.mxu0 0
        %2298 = vmatpush1.bf16.msra.mxu0 0
        %2299 = vmatprep.subr.bf16.mxu0 0
        %2300 = vmatpush1.bf16.msra.mxu0 0
        %2301 = vmatprep.mubr.bf16.mxu0 0
        %2302 = vmatmul.mubr.bf16.gmra.mrb[0].mxu0 %v2267
        %v2303 = vpop.f32.mrb[0].mxu0
        %v2304 = vadd.f32 %v2263, %v2303
        %v2305 = vpop.f32.mrb[0].mxu0
        %v2306 = vpop.f32.mrb[0].mxu0
        %v2307 = vpop.f32.mrb[0].mxu0
        %2308 = vdwg.mxu0
        %2309 = vst [vmem:[%s617] sm:$0x7] %v2304
        %p2310 = scmp.lt.s32.totalorder %s28, 1
        %s2311 = scalar_select %p2310, %s28, 1
        %p2312 = scmp.lt.s32.totalorder %s29, 1
        %s2313 = scalar_select %p2312, %s29, 1
        %s2314 = smul.addr %s2311, 2
        %s2315 = sadd.s32 %s2313, %s2314
        %s2316 = smul.addr %s2315, 4
        %s2317 = scalar_lea.vmem %s12, %s2316
        // Predicated region
        $region114: #{tpu_custom_call.1} parent=104 // pred_check
          %p2318 = pneg %p315
        $region115: #{tpu_custom_call.1} parent=104 // pred_check_branch
          %2320 = sbr.rel (%p2318) target = $region117
        $region116: #{tpu_custom_call.1} parent=104 // pred_region
          _
        $region117: #{tpu_custom_call.1} parent=104 // pred_fallthru
          _
      $region105: #{tpu_custom_call.1} parent=5 // pred_fallthru
        _
      %p2321 = scmp.le.s32.totalorder 2, %s19
      // Predicated region
      $region118: #{tpu_custom_call.1} parent=5 // pred_check
        %p2322 = pneg %p2321
      $region119: #{tpu_custom_call.1} parent=5 // pred_check_branch
        %2324 = sbr.rel (%p2322) target = $region121
      $region120: #{tpu_custom_call.1} parent=5 // pred_region
        %s2325 = ssub.s32 %s19, 2
        // Predicated region
        $region122: #{tpu_custom_call.1} parent=120 // pred_check
          %p2326 = pneg %p321
        $region123: #{tpu_custom_call.1} parent=120 // pred_check_branch
          %2328 = sbr.rel (%p2326) target = $region125
        $region124: #{tpu_custom_call.1} parent=120 // pred_region
          %p2329 = scmp.lt.s32.totalorder %s30, 1
          %s2330 = scalar_select %p2329, %s30, 1
          %p2331 = scmp.lt.s32.totalorder %s31, 1
          %s2332 = scalar_select %p2331, %s31, 1
          %s2333 = smul.addr %s2330, 2
          %s2334 = sadd.s32 %s2332, %s2333
          %s2335 = smul.addr %s2334, 4
          %s2336 = scalar_lea.vmem %s12, %s2335
        $region125: #{tpu_custom_call.1} parent=120 // pred_fallthru
          _
      $region121: #{tpu_custom_call.1} parent=5 // pred_fallthru
        _
    $region6: #{tpu_custom_call.1} parent=1 // loop_footer
      %s23 = sadd.s32 1, %s19
    $region7: #{tpu_custom_call.1} parent=1 // loop_footer_branch
      %18 = sbr.rel target = $region3
    $region8: #{tpu_custom_call.1} parent=1 // loop_exit
      _
    %2337 = vsyncpa [#allocation4], 1
    %s2338 = scalar_lea.sflag [#allocation4], 1
    %2339 = vsyncpa %s2338, 1

</llo_original>
